<compile_context>
chip_gen: v7x
topology: tpu7x:2x2x1
jax: 0.10.0
libtpu: 0.0.40
codegen_flags: <defaults>
</compile_context>

<pallas_src>
import functools

import jax
import jax.numpy as jnp
from jax import lax
from jax.experimental import pallas as pl
from jax.experimental.pallas import tpu as pltpu

FRAME = 640            # samples per frame (matches the `// 640 * 640` truncation)
HIDDEN_DIM = 32        # stand-in for options['hidden-dim']
NUM_CLASSES = 16       # stand-in for options['num-classes']
H_PAD = 128            # hidden dim padded to a full lane width
C_PAD = 128            # class dim padded to a full lane width (sliced in wrapper)

KF_MAX = 1024          # frames / grid step / stream: 2.5 MiB f32 audio tile each,
                       # 2 streams x 2 pipeline buffers ~= 10 MiB of VMEM
CC_MAX = 65536         # stats column chunk (multiple of 128); ~8-16 MiB of tiles
STATS_JNP_MIN = 32 * 1024   # below this many samples, stats launch isn't worth it
VMEM_LIMIT = 48 * 1024 * 1024  # fits v7x (64 MiB physical); ample on v5e/v6e


# ----------------------------------------------------------------------------
# Kernel 1: per-row stats, column-tiled.  Accumulates sum / sum-of-squares per
# row across column chunks and emits (mean, 1/std) (unbiased, n-1) on the last
# chunk.  The normalized audio itself is never materialized.
# ----------------------------------------------------------------------------
def _stats_kernel(total_len, cc, need_mask,
                  xr_ref, xf_ref,
                  mr_ref, ir_ref, mf_ref, if_ref,
                  sr_ref, qr_ref, sf_ref, qf_ref):
    j = pl.program_id(1)

    @pl.when(j == 0)
    def _init():
        for ref in (sr_ref, qr_ref, sf_ref, qf_ref):
            ref[...] = jnp.zeros_like(ref)

    if need_mask:
        col = j * cc + lax.broadcasted_iota(jnp.int32, (1, cc), 1)
        valid = col < total_len

    def accum(x_ref, s_ref, q_ref):
        x = x_ref[...]
        if need_mask:
            x = jnp.where(valid, x, 0.0)
        s_ref[...] += jnp.sum(x, axis=-1, keepdims=True)
        q_ref[...] += jnp.sum(x * x, axis=-1, keepdims=True)

    accum(xr_ref, sr_ref, qr_ref)
    accum(xf_ref, sf_ref, qf_ref)

    @pl.when(j == pl.num_programs(1) - 1)
    def _finish():
        n = jnp.float32(total_len)

        def finalize(s_ref, q_ref, m_ref, i_ref):
            mean = s_ref[...] / n
            # TODO(synk): sum/sumsq variance is less stable than two-pass /
            # Welford for near-constant rows with a large offset.
            var = jnp.maximum((q_ref[...] - n * mean * mean) / (n - 1.0), 0.0)
            m_ref[...] = mean
            i_ref[...] = lax.rsqrt(var)   # std==0 -> inf, matching torch's x/0

        finalize(sr_ref, qr_ref, mr_ref, ir_ref)
        finalize(sf_ref, qf_ref, mf_ref, if_ref)


def row_stats_pallas(xr, xf):
    """xr, xf: (B, T) f32.  Returns (mean_r, inv_r, mean_f, inv_f), each (B, 1)."""
    B, T = xr.shape
    rb = min(B, 8)
    cc = T if T <= CC_MAX else CC_MAX
    need_mask = (T % cc) != 0
    grid = (pl.cdiv(B, rb), pl.cdiv(T, cc))

    in_spec = pl.BlockSpec((rb, cc), lambda i, j: (i, j))
    out_spec = pl.BlockSpec((rb, 1), lambda i, j: (i, 0))
    stat = jax.ShapeDtypeStruct((B, 1), jnp.float32)

    kernel = functools.partial(_stats_kernel, T, cc, need_mask)
    return pl.pallas_call(
        kernel,
        out_shape=(stat, stat, stat, stat),
        grid=grid,
        in_specs=[in_spec, in_spec],
        out_specs=[out_spec, out_spec, out_spec, out_spec],
        scratch_shapes=[pltpu.VMEM((rb, 1), jnp.float32) for _ in range(4)],
        compiler_params=pltpu.CompilerParams(
            dimension_semantics=("parallel", "arbitrary"),
            vmem_limit_bytes=VMEM_LIMIT),
    )(xr, xf)


def _row_stats_jnp(x):
    """Tiny-input path: one fused XLA reduction instead of an extra launch."""
    mean = jnp.mean(x, axis=-1, keepdims=True)
    var = jnp.var(x, axis=-1, ddof=1, keepdims=True)   # unbiased, matches torch.std
    return mean, lax.rsqrt(var)


# ----------------------------------------------------------------------------
# Kernel 2: fused model.  Grid = (batch row, frame chunk).  Each step loads kf
# frames of BOTH streams for one batch row, normalizes in-register with the
# SMEM stats, runs a single (2*kf, FRAME) @ (FRAME, H_PAD) bf16 MXU matmul
# (f32 acc) + ReLU, reduces the frame axis once, and adds to the per-row VMEM
# accumulator.  The classifier head runs on the last frame chunk.
# ----------------------------------------------------------------------------
def _model_kernel(num_frames, kf, need_mask,
                  mr_ref, ir_ref, mf_ref, if_ref,        # SMEM (B, 1) stats
                  xr_ref, xf_ref,                        # VMEM (kf, FRAME) chunks
                  w1_ref, b1_ref, w2_ref, b2_ref,        # VMEM weights (resident)
                  or_ref, of_ref,                        # VMEM (1, C_PAD) outputs
                  accr_ref, accf_ref):                   # VMEM (1, H_PAD) accums
    b = pl.program_id(0)
    t = pl.program_id(1)

    @pl.when(t == 0)
    def _init():
        accr_ref[...] = jnp.zeros_like(accr_ref)
        accf_ref[...] = jnp.zeros_like(accf_ref)

    # Normalize both streams with their per-row scalars and stack them along
    # the MXU M axis so one weight residency serves 2*kf frame rows.
    xr = (xr_ref[...] - mr_ref[b, 0]) * ir_ref[b, 0]
    xf = (xf_ref[...] - mf_ref[b, 0]) * if_ref[b, 0]
    x = jnp.concatenate([xr, xf], axis=0).astype(w1_ref.dtype)       # (2*kf, FRAME)

    feats = jnp.dot(x, w1_ref[...], preferred_element_type=jnp.float32)
    feats = jnp.maximum(feats + b1_ref[...], 0.0)                    # (2*kf, H_PAD)

    if need_mask:   # zero the clipped tail frames of the last chunk (one iota)
        fidx = t * kf + lax.broadcasted_iota(jnp.int32, (kf, 1), 0)
        valid = fidx < num_frames
        feats = jnp.where(jnp.concatenate([valid, valid], axis=0), feats, 0.0)

    # One accumulator update per grid step (frame axis reduced in registers).
    accr_ref[...] += jnp.sum(feats[:kf], axis=0, keepdims=True)
    accf_ref[...] += jnp.sum(feats[kf:], axis=0, keepdims=True)

    @pl.when(t == pl.num_programs(1) - 1)
    def _finish():
        scale = jnp.float32(1.0 / num_frames)
        pooled = jnp.concatenate([accr_ref[...], accf_ref[...]], axis=0) * scale
        logits = jnp.dot(pooled, w2_ref[...],
                         preferred_element_type=jnp.float32) + b2_ref[...]
        or_ref[...] = logits[0:1]
        of_ref[...] = logits[1:2]


def model_logits(xr, xf, stats, params):
    """xr, xf: (B, T) raw audio.  Returns (logits_real, logits_fake), (B, NUM_CLASSES)."""
    w1, b1, w2, b2 = params
    mr, ir, mf, if_ = stats
    B, T = xr.shape
    num_frames = T // FRAME
    assert num_frames >= 1, "audio shorter than one frame (640 samples)"

    # Frame the truncated audio: (B, T) -> (B, NF, FRAME).  The reshape is a
    # free bitcast; the truncating slice copies only when T % 640 != 0.
    t_tr = num_frames * FRAME
    xr3 = xr[:, :t_tr].reshape(B, num_frames, FRAME)
    xf3 = xf[:, :t_tr].reshape(B, num_frames, FRAME)

    # Frames per grid step: budget-driven so the MXU M dim (2*kf rows) is big
    # and the double-buffered audio tiles stay ~10 MiB (fits every generation,
    # including v7x's 64 MiB physical VMEM).
    kf = min(num_frames, KF_MAX)
    if kf < num_frames:
        kf = max(8, (kf // 8) * 8)
    nt = pl.cdiv(num_frames, kf)
    need_mask = (num_frames % kf) != 0

    smem_spec = pl.BlockSpec(memory_space=pltpu.MemorySpace.SMEM)
    audio_spec = pl.BlockSpec((None, kf, FRAME), lambda b, t: (b, t, 0))
    full = lambda shape: pl.BlockSpec(shape, lambda b, t: (0,) * len(shape))
    out_spec = pl.BlockSpec((None, 1, C_PAD), lambda b, t: (b, 0, 0))

    kernel = functools.partial(_model_kernel, num_frames, kf, need_mask)
    out_r, out_f = pl.pallas_call(
        kernel,
        out_shape=(jax.ShapeDtypeStruct((B, 1, C_PAD), jnp.float32),
                   jax.ShapeDtypeStruct((B, 1, C_PAD), jnp.float32)),
        grid=(B, nt),
        in_specs=[smem_spec, smem_spec, smem_spec, smem_spec,
                  audio_spec, audio_spec,
                  full((FRAME, H_PAD)), full((1, H_PAD)),
                  full((H_PAD, C_PAD)), full((1, C_PAD))],
        out_specs=[out_spec, out_spec],
        scratch_shapes=[pltpu.VMEM((1, H_PAD), jnp.float32),
                        pltpu.VMEM((1, H_PAD), jnp.float32)],
        compiler_params=pltpu.CompilerParams(
            dimension_semantics=("parallel", "arbitrary"),  # batch rows spread
            vmem_limit_bytes=VMEM_LIMIT),                   # over v7x's 2 cores
    )(mr, ir, mf, if_, xr3, xf3, w1, b1, w2, b2)

    return (out_r.reshape(B, C_PAD)[:, :NUM_CLASSES],
            out_f.reshape(B, C_PAD)[:, :NUM_CLASSES])


# ----------------------------------------------------------------------------
# Parameters (deterministic stand-in weights, zero-padded to lane-dense shapes)
# ----------------------------------------------------------------------------
def init_params(key):
    k1, k2 = jax.random.split(key)
    w1 = jnp.zeros((FRAME, H_PAD), jnp.float32).at[:, :HIDDEN_DIM].set(
        jax.random.normal(k1, (FRAME, HIDDEN_DIM), jnp.float32) * 0.02)
    b1 = jnp.zeros((1, H_PAD), jnp.float32)
    w2 = jnp.zeros((H_PAD, C_PAD), jnp.float32).at[:HIDDEN_DIM, :NUM_CLASSES].set(
        jax.random.normal(k2, (HIDDEN_DIM, NUM_CLASSES), jnp.float32) * 0.1)
    b2 = jnp.zeros((1, C_PAD), jnp.float32)
    return (w1.astype(jnp.bfloat16), b1, w2, b2)


# ----------------------------------------------------------------------------
# Full forward, mirroring LRW_WER_Model.forward
# ----------------------------------------------------------------------------
def lrw_wer_forward(audio_real, audio_fake, audio_lengths, params):
    # TODO(synk): audio_lengths is ignored (no length-masked temporal pooling).
    del audio_lengths
    B = audio_fake.shape[0]
    xr = audio_real.reshape(B, -1)    # (B, 1, T) -> (B, T), free squeeze
    xf = audio_fake.reshape(B, -1)

    if xr.shape[-1] * B < STATS_JNP_MIN:
        # Tiny input: launch overhead of a separate stats kernel dominates.
        mr, ir = _row_stats_jnp(xr)
        mf, if_ = _row_stats_jnp(xf)
        stats = (mr, ir, mf, if_)
    else:
        stats = row_stats_pallas(xr, xf)

    logits_r, logits_f = model_logits(xr, xf, stats, params)

    # argmax(softmax(x)) == argmax(x); softmax dropped.
    preds_real = jnp.argmax(logits_r, axis=1)
    preds_fake = jnp.argmax(logits_f, axis=1)
    correct = jnp.sum(preds_fake == preds_real)
    return (B - correct).astype(jnp.float32) / jnp.float32(B)


# Pure-jnp reference of the stand-in model, for a numeric sanity check.
def _reference_logits(x, params):
    w1, b1, w2, b2 = params
    mean = jnp.mean(x, axis=-1, keepdims=True)
    std = jnp.std(x, axis=-1, ddof=1, keepdims=True)
    xn = (x - mean) / std
    nf = x.shape[-1] // FRAME
    fr = xn[:, :nf * FRAME].reshape(x.shape[0], nf, FRAME)
    h = jnp.maximum(jnp.einsum("bnf,fh->bnh", fr, w1.astype(jnp.float32)) + b1, 0.0)
    pooled = jnp.mean(h, axis=1)
    return (pooled @ w2 + b2)[:, :NUM_CLASSES]


if __name__ == "__main__":
    key = jax.random.PRNGKey(0)
    k1, k2, k3, k4, kp = jax.random.split(key, 5)
    params = init_params(kp)
    fwd = jax.jit(lrw_wer_forward)

    # Case 1: tiny clip (jnp stats path, single frame chunk).
    B, T = 2, 1300                                   # truncates to 1280 -> 2 frames
    ar = jax.random.normal(k1, (B, 1, T), jnp.float32)
    af = ar + 0.01 * jax.random.normal(k2, (B, 1, T), jnp.float32)
    lens = jnp.full((B,), T, dtype=jnp.int32)
    wer = fwd(ar, af, lens, params)
    jax.block_until_ready(wer)
    assert wer.shape == () and wer.dtype == jnp.float32

    # Case 2: longer clip exercising the Pallas column-tiled stats (with tail
    # mask) and the multi-chunk frame reduction (with frame tail mask).
    B2, T2 = 2, 1100 * FRAME + 100
    ar2 = jax.random.normal(k3, (B2, 1, T2), jnp.float32)
    af2 = ar2 + 0.01 * jax.random.normal(k4, (B2, 1, T2), jnp.float32)
    lens2 = jnp.full((B2,), T2, dtype=jnp.int32)
    wer2 = fwd(ar2, af2, lens2, params)
    jax.block_until_ready(wer2)
    assert wer2.shape == () and wer2.dtype == jnp.float32

    # Numeric sanity check of the kernels against the jnp reference (bf16 W1
    # path -> loose tolerance).
    xr2, xf2 = ar2.reshape(B2, -1), af2.reshape(B2, -1)
    stats2 = row_stats_pallas(xr2, xf2)
    logits_r2, _ = model_logits(xr2, xf2, stats2, params)
    ref_r2 = _reference_logits(xr2, params)
    assert jnp.allclose(logits_r2, ref_r2, rtol=5e-2, atol=2e-2)

    print("KERNEL_OK")
</pallas_src>

<mosaic_0001>
module attributes {stable_mosaic.version = 11 : i64} {
  func.func @_model_kernel(%arg0: i32, %arg1: i32, %arg2: memref<2x1xf32, #tpu.memory_space<smem>>, %arg3: memref<2x1xf32, #tpu.memory_space<smem>>, %arg4: memref<2x1xf32, #tpu.memory_space<smem>>, %arg5: memref<2x1xf32, #tpu.memory_space<smem>>, %arg6: memref<1x2x640xf32, #tpu.memory_space<vmem>>, %arg7: memref<1x2x640xf32, #tpu.memory_space<vmem>>, %arg8: memref<640x128xbf16, #tpu.memory_space<vmem>>, %arg9: memref<1x128xf32, #tpu.memory_space<vmem>>, %arg10: memref<128x128xf32, #tpu.memory_space<vmem>>, %arg11: memref<1x128xf32, #tpu.memory_space<vmem>>, %arg12: memref<1x1x128xf32, #tpu.memory_space<vmem>>, %arg13: memref<1x1x128xf32, #tpu.memory_space<vmem>>, %arg14: memref<1x128xf32, #tpu.memory_space<vmem>>, %arg15: memref<1x128xf32, #tpu.memory_space<vmem>>) attributes {dimension_semantics = [#tpu.dimension_semantics<parallel>, #tpu.dimension_semantics<arbitrary>], iteration_bounds = array<i64: 2, 1>, scalar_prefetch = 0 : i64, scratch_operands = 2 : i64, tpu.core_type = #tpu.core_type<tc>, window_params = [{transform_indices = @transform_0, window_bounds = array<i64: 2, 1>}, {transform_indices = @transform_1, window_bounds = array<i64: 2, 1>}, {transform_indices = @transform_2, window_bounds = array<i64: 2, 1>}, {transform_indices = @transform_3, window_bounds = array<i64: 2, 1>}, {transform_indices = @transform_4, window_bounds = array<i64: 1, 2, 640>}, {transform_indices = @transform_5, window_bounds = array<i64: 1, 2, 640>}, {pipeline_mode = #tpu.pipeline_mode<synchronous>, transform_indices = @transform_6, window_bounds = array<i64: 640, 128>}, {pipeline_mode = #tpu.pipeline_mode<synchronous>, transform_indices = @transform_7, window_bounds = array<i64: 1, 128>}, {pipeline_mode = #tpu.pipeline_mode<synchronous>, transform_indices = @transform_8, window_bounds = array<i64: 128, 128>}, {pipeline_mode = #tpu.pipeline_mode<synchronous>, transform_indices = @transform_9, window_bounds = array<i64: 1, 128>}, {transform_indices = @transform_10, window_bounds = array<i64: 1, 1, 128>}, {transform_indices = @transform_11, window_bounds = array<i64: 1, 1, 128>}]} {
    %c0_i32 = arith.constant 0 : i32
    %0 = arith.cmpi eq, %arg1, %c0_i32 : i32
    %1 = arith.extui %0 : i1 to i32
    %c0_i32_0 = arith.constant 0 : i32
    %2 = arith.cmpi ne, %1, %c0_i32_0 : i32
    scf.if %2 {
      %cst_27 = arith.constant 0.000000e+00 : f32
      %47 = vector.broadcast %cst_27 : f32 to vector<1x128xf32>
      %c0_28 = arith.constant 0 : index
      %c0_29 = arith.constant 0 : index
      %48 = vector.load %arg14[%c0_28, %c0_29] : memref<1x128xf32, #tpu.memory_space<vmem>>, vector<1x128xf32>
      tpu.vector_store %arg14[%c0_28, %c0_29], %47 {strides = array<i32>} : memref<1x128xf32, #tpu.memory_space<vmem>>, vector<1x128xf32>,
      %cst_30 = arith.constant 0.000000e+00 : f32
      %49 = vector.broadcast %cst_30 : f32 to vector<1x128xf32>
      %c0_31 = arith.constant 0 : index
      %c0_32 = arith.constant 0 : index
      %50 = vector.load %arg15[%c0_31, %c0_32] : memref<1x128xf32, #tpu.memory_space<vmem>>, vector<1x128xf32>
      tpu.vector_store %arg15[%c0_31, %c0_32], %49 {strides = array<i32>} : memref<1x128xf32, #tpu.memory_space<vmem>>, vector<1x128xf32>,
    } else {
    }
    %c0 = arith.constant 0 : index
    %c0_1 = arith.constant 0 : index
    %c0_2 = arith.constant 0 : index
    %3 = vector.load %arg6[%c0, %c0_1, %c0_2] : memref<1x2x640xf32, #tpu.memory_space<vmem>>, vector<1x2x640xf32>
    %4 = vector.shape_cast %3 : vector<1x2x640xf32> to vector<2x640xf32>
    %5 = arith.index_cast %arg0 : i32 to index
    %c0_3 = arith.constant 0 : index
    %6 = memref.load %arg2[%5, %c0_3] : memref<2x1xf32, #tpu.memory_space<smem>>
    %7 = vector.broadcast %6 : f32 to vector<2x640xf32>
    %8 = arith.subf %4, %7 : vector<2x640xf32>
    %9 = arith.index_cast %arg0 : i32 to index
    %c0_4 = arith.constant 0 : index
    %10 = memref.load %arg3[%9, %c0_4] : memref<2x1xf32, #tpu.memory_space<smem>>
    %11 = vector.broadcast %10 : f32 to vector<2x640xf32>
    %12 = arith.mulf %8, %11 : vector<2x640xf32>
    %c0_5 = arith.constant 0 : index
    %c0_6 = arith.constant 0 : index
    %c0_7 = arith.constant 0 : index
    %13 = vector.load %arg7[%c0_5, %c0_6, %c0_7] : memref<1x2x640xf32, #tpu.memory_space<vmem>>, vector<1x2x640xf32>
    %14 = vector.shape_cast %13 : vector<1x2x640xf32> to vector<2x640xf32>
    %15 = arith.index_cast %arg0 : i32 to index
    %c0_8 = arith.constant 0 : index
    %16 = memref.load %arg4[%15, %c0_8] : memref<2x1xf32, #tpu.memory_space<smem>>
    %17 = vector.broadcast %16 : f32 to vector<2x640xf32>
    %18 = arith.subf %14, %17 : vector<2x640xf32>
    %19 = arith.index_cast %arg0 : i32 to index
    %c0_9 = arith.constant 0 : index
    %20 = memref.load %arg5[%19, %c0_9] : memref<2x1xf32, #tpu.memory_space<smem>>
    %21 = vector.broadcast %20 : f32 to vector<2x640xf32>
    %22 = arith.mulf %18, %21 : vector<2x640xf32>
    %23 = tpu.concatenate %12, %22 in 0 : vector<2x640xf32>, vector<2x640xf32> -> vector<4x640xf32>
    %24 = arith.truncf %23 : vector<4x640xf32> to vector<4x640xbf16>
    %c0_10 = arith.constant 0 : index
    %c0_11 = arith.constant 0 : index
    %25 = vector.load %arg8[%c0_10, %c0_11] : memref<640x128xbf16, #tpu.memory_space<vmem>>, vector<640x128xbf16>
    %cst = arith.constant dense<0.000000e+00> : vector<4x128xf32>
    %26 = tpu.matmul %24, %25, %cst {dimension_numbers = #tpu.dot_dimension_numbers<[1], [0], [0], [1], [0, 0, 1, 1], [], []>} : vector<4x640xbf16>, vector<640x128xbf16>, vector<4x128xf32> -> vector<4x128xf32>
    %c0_12 = arith.constant 0 : index
    %c0_13 = arith.constant 0 : index
    %27 = vector.load %arg9[%c0_12, %c0_13] : memref<1x128xf32, #tpu.memory_space<vmem>>, vector<1x128xf32>
    %28 = vector.broadcast %27 : vector<1x128xf32> to vector<4x128xf32>
    %29 = arith.addf %26, %28 : vector<4x128xf32>
    %cst_14 = arith.constant 0.000000e+00 : f32
    %30 = vector.broadcast %cst_14 : f32 to vector<4x128xf32>
    %31 = arith.maximumf %29, %30 : vector<4x128xf32>
    %c0_15 = arith.constant 0 : index
    %c0_16 = arith.constant 0 : index
    %32 = vector.load %arg14[%c0_15, %c0_16] : memref<1x128xf32, #tpu.memory_space<vmem>>, vector<1x128xf32>
    %33 = vector.extract_strided_slice %31 {offsets = [0, 0], sizes = [2, 128], strides = [1, 1]} : vector<4x128xf32> to vector<2x128xf32>
    %cst_17 = arith.constant dense<0.000000e+00> : vector<128xf32>
    %34 = vector.multi_reduction <add>, %33, %cst_17 [0] : vector<2x128xf32> to vector<128xf32>
    %35 = vector.shape_cast %34 : vector<128xf32> to vector<1x128xf32>
    %36 = arith.addf %32, %35 : vector<1x128xf32>
    %c0_18 = arith.constant 0 : index
    %c0_19 = arith.constant 0 : index
    %37 = vector.load %arg14[%c0_18, %c0_19] : memref<1x128xf32, #tpu.memory_space<vmem>>, vector<1x128xf32>
    tpu.vector_store %arg14[%c0_18, %c0_19], %36 {strides = array<i32>} : memref<1x128xf32, #tpu.memory_space<vmem>>, vector<1x128xf32>,
    %c0_20 = arith.constant 0 : index
    %c0_21 = arith.constant 0 : index
    %38 = vector.load %arg15[%c0_20, %c0_21] : memref<1x128xf32, #tpu.memory_space<vmem>>, vector<1x128xf32>
    %39 = vector.extract_strided_slice %31 {offsets = [2, 0], sizes = [2, 128], strides = [1, 1]} : vector<4x128xf32> to vector<2x128xf32>
    %cst_22 = arith.constant dense<0.000000e+00> : vector<128xf32>
    %40 = vector.multi_reduction <add>, %39, %cst_22 [0] : vector<2x128xf32> to vector<128xf32>
    %41 = vector.shape_cast %40 : vector<128xf32> to vector<1x128xf32>
    %42 = arith.addf %38, %41 : vector<1x128xf32>
    %c0_23 = arith.constant 0 : index
    %c0_24 = arith.constant 0 : index
    %43 = vector.load %arg15[%c0_23, %c0_24] : memref<1x128xf32, #tpu.memory_space<vmem>>, vector<1x128xf32>
    tpu.vector_store %arg15[%c0_23, %c0_24], %42 {strides = array<i32>} : memref<1x128xf32, #tpu.memory_space<vmem>>, vector<1x128xf32>,
    %c0_i32_25 = arith.constant 0 : i32
    %44 = arith.cmpi eq, %arg1, %c0_i32_25 : i32
    %45 = arith.extui %44 : i1 to i32
    %c0_i32_26 = arith.constant 0 : i32
    %46 = arith.cmpi ne, %45, %c0_i32_26 : i32
    scf.if %46 {
      %c0_27 = arith.constant 0 : index
      %c0_28 = arith.constant 0 : index
      %47 = vector.load %arg14[%c0_27, %c0_28] : memref<1x128xf32, #tpu.memory_space<vmem>>, vector<1x128xf32>
      %c0_29 = arith.constant 0 : index
      %c0_30 = arith.constant 0 : index
      %48 = vector.load %arg15[%c0_29, %c0_30] : memref<1x128xf32, #tpu.memory_space<vmem>>, vector<1x128xf32>
      %49 = tpu.concatenate %47, %48 in 0 : vector<1x128xf32>, vector<1x128xf32> -> vector<2x128xf32>
      %cst_31 = arith.constant 5.000000e-01 : f32
      %50 = vector.broadcast %cst_31 : f32 to vector<2x128xf32>
      %51 = arith.mulf %49, %50 : vector<2x128xf32>
      %c0_32 = arith.constant 0 : index
      %c0_33 = arith.constant 0 : index
      %52 = vector.load %arg10[%c0_32, %c0_33] : memref<128x128xf32, #tpu.memory_space<vmem>>, vector<128x128xf32>
      %cst_34 = arith.constant dense<0.000000e+00> : vector<2x128xf32>
      %53 = tpu.matmul %51, %52, %cst_34 {dimension_numbers = #tpu.dot_dimension_numbers<[1], [0], [0], [1], [0, 0, 1, 1], [], []>} : vector<2x128xf32>, vector<128x128xf32>, vector<2x128xf32> -> vector<2x128xf32>
      %c0_35 = arith.constant 0 : index
      %c0_36 = arith.constant 0 : index
      %54 = vector.load %arg11[%c0_35, %c0_36] : memref<1x128xf32, #tpu.memory_space<vmem>>, vector<1x128xf32>
      %55 = vector.broadcast %54 : vector<1x128xf32> to vector<2x128xf32>
      %56 = arith.addf %53, %55 : vector<2x128xf32>
      %57 = vector.extract_strided_slice %56 {offsets = [0, 0], sizes = [1, 128], strides = [1, 1]} : vector<2x128xf32> to vector<1x128xf32>
      %c0_37 = arith.constant 0 : index
      %c0_38 = arith.constant 0 : index
      %c0_39 = arith.constant 0 : index
      %58 = vector.load %arg12[%c0_37, %c0_38, %c0_39] : memref<1x1x128xf32, #tpu.memory_space<vmem>>, vector<1x1x128xf32>
      %59 = vector.shape_cast %58 : vector<1x1x128xf32> to vector<1x128xf32>
      %60 = vector.shape_cast %57 : vector<1x128xf32> to vector<1x1x128xf32>
      tpu.vector_store %arg12[%c0_37, %c0_38, %c0_39], %60 {strides = array<i32>} : memref<1x1x128xf32, #tpu.memory_space<vmem>>, vector<1x1x128xf32>,
      %61 = vector.extract_strided_slice %56 {offsets = [1, 0], sizes = [1, 128], strides = [1, 1]} : vector<2x128xf32> to vector<1x128xf32>
      %c0_40 = arith.constant 0 : index
      %c0_41 = arith.constant 0 : index
      %c0_42 = arith.constant 0 : index
      %62 = vector.load %arg13[%c0_40, %c0_41, %c0_42] : memref<1x1x128xf32, #tpu.memory_space<vmem>>, vector<1x1x128xf32>
      %63 = vector.shape_cast %62 : vector<1x1x128xf32> to vector<1x128xf32>
      %64 = vector.shape_cast %61 : vector<1x128xf32> to vector<1x1x128xf32>
      tpu.vector_store %arg13[%c0_40, %c0_41, %c0_42], %64 {strides = array<i32>} : memref<1x1x128xf32, #tpu.memory_space<vmem>>, vector<1x1x128xf32>,
    } else {
    }
    return
  }
  func.func @transform_0(%arg0: i32, %arg1: i32) -> (i32, i32) {
    %c0_i32 = arith.constant 0 : i32
    %c0_i32_0 = arith.constant 0 : i32
    %c0_i32_1 = arith.constant 0 : i32
    return %c0_i32, %c0_i32_0 : i32, i32
  }
  func.func @transform_1(%arg0: i32, %arg1: i32) -> (i32, i32) {
    %c0_i32 = arith.constant 0 : i32
    %c0_i32_0 = arith.constant 0 : i32
    %c0_i32_1 = arith.constant 0 : i32
    return %c0_i32, %c0_i32_0 : i32, i32
  }
  func.func @transform_2(%arg0: i32, %arg1: i32) -> (i32, i32) {
    %c0_i32 = arith.constant 0 : i32
    %c0_i32_0 = arith.constant 0 : i32
    %c0_i32_1 = arith.constant 0 : i32
    return %c0_i32, %c0_i32_0 : i32, i32
  }
  func.func @transform_3(%arg0: i32, %arg1: i32) -> (i32, i32) {
    %c0_i32 = arith.constant 0 : i32
    %c0_i32_0 = arith.constant 0 : i32
    %c0_i32_1 = arith.constant 0 : i32
    return %c0_i32, %c0_i32_0 : i32, i32
  }
  func.func @transform_4(%arg0: i32, %arg1: i32) -> (i32, i32, i32) {
    %c0_i32 = arith.constant 0 : i32
    %c0_i32_0 = arith.constant 0 : i32
    return %arg0, %arg1, %c0_i32 : i32, i32, i32
  }
  func.func @transform_5(%arg0: i32, %arg1: i32) -> (i32, i32, i32) {
    %c0_i32 = arith.constant 0 : i32
    %c0_i32_0 = arith.constant 0 : i32
    return %arg0, %arg1, %c0_i32 : i32, i32, i32
  }
  func.func @transform_6(%arg0: i32, %arg1: i32) -> (i32, i32) {
    %c0_i32 = arith.constant 0 : i32
    %c0_i32_0 = arith.constant 0 : i32
    %c0_i32_1 = arith.constant 0 : i32
    return %c0_i32, %c0_i32_0 : i32, i32
  }
  func.func @transform_7(%arg0: i32, %arg1: i32) -> (i32, i32) {
    %c0_i32 = arith.constant 0 : i32
    %c0_i32_0 = arith.constant 0 : i32
    %c0_i32_1 = arith.constant 0 : i32
    return %c0_i32, %c0_i32_0 : i32, i32
  }
  func.func @transform_8(%arg0: i32, %arg1: i32) -> (i32, i32) {
    %c0_i32 = arith.constant 0 : i32
    %c0_i32_0 = arith.constant 0 : i32
    %c0_i32_1 = arith.constant 0 : i32
    return %c0_i32, %c0_i32_0 : i32, i32
  }
  func.func @transform_9(%arg0: i32, %arg1: i32) -> (i32, i32) {
    %c0_i32 = arith.constant 0 : i32
    %c0_i32_0 = arith.constant 0 : i32
    %c0_i32_1 = arith.constant 0 : i32
    return %c0_i32, %c0_i32_0 : i32, i32
  }
  func.func @transform_10(%arg0: i32, %arg1: i32) -> (i32, i32, i32) {
    %c0_i32 = arith.constant 0 : i32
    %c0_i32_0 = arith.constant 0 : i32
    %c0_i32_1 = arith.constant 0 : i32
    return %arg0, %c0_i32, %c0_i32_0 : i32, i32, i32
  }
  func.func @transform_11(%arg0: i32, %arg1: i32) -> (i32, i32, i32) {
    %c0_i32 = arith.constant 0 : i32
    %c0_i32_0 = arith.constant 0 : i32
    %c0_i32_1 = arith.constant 0 : i32
    return %arg0, %c0_i32, %c0_i32_0 : i32, i32, i32
  }
}

</mosaic_0001>

<llo_original>
// kernel: lrw_wer_forward.1
$region0: #{lrw_wer_forward.1}
  #allocation0 [shape = 'u32[]', space=smem, size = 0x4, offset = 0x4, fixed_abs, tag = 'smem constant byte address 0x4 - core index']
  #allocation1 [shape = 'u32[144,128]{1,0:T(1,128)}', space=vmem, size = 0x12000, scoped, tag = 'internal scratch']
  #allocation2 [shape = 'f32[1,128]{1,0:T(1,128)}', space=vmem, size = 0x200, scoped, tag = 'scratch operand']
  #allocation3 [shape = 'f32[1,128]{1,0:T(1,128)}', space=vmem, size = 0x200, scoped, tag = 'scratch operand']
  %s0 = inlined_call_operand.vmem [shape: f32[2,1], index: 0, kind: input, shape index: {}]
  %s1 = inlined_call_operand.vmem [shape: f32[2,1], index: 1, kind: input, shape index: {}]
  %s2 = inlined_call_operand.vmem [shape: f32[2,1], index: 2, kind: input, shape index: {}]
  %s3 = inlined_call_operand.vmem [shape: f32[2,1], index: 3, kind: input, shape index: {}]
  %s4 = inlined_call_operand.vmem [shape: f32[2,2,640], index: 4, kind: input, shape index: {}]
  %s5 = inlined_call_operand.vmem [shape: f32[2,2,640], index: 5, kind: input, shape index: {}]
  %s6 = inlined_call_operand.vmem [shape: bf16[640,128], index: 6, kind: input, shape index: {}]
  %s7 = inlined_call_operand.vmem [shape: f32[1,128], index: 7, kind: input, shape index: {}]
  %s8 = inlined_call_operand.hbm [shape: f32[128,128], index: 8, kind: input, shape index: {}]
  %s9 = inlined_call_operand.vmem [shape: f32[1,128], index: 9, kind: input, shape index: {}]
  %s10 = inlined_call_operand.vmem [shape: f32[2,1,128], index: 10, kind: output, shape index: {0}]
  %s11 = inlined_call_operand.vmem [shape: f32[2,1,128], index: 11, kind: output, shape index: {1}]
  %12 = xla_tuple %s10, %s11
  %s13 = sld [smem:[#allocation0]]
  $region109: #{lrw_wer_forward.1} parent=0
    _
  %s15 = ssub.s32 1, %s13
  %s16 = scalar_select 0, %s15, %s13
  $region1: #{lrw_wer_forward.1} parent=0
    #allocation4 [shape = 'u8[1024]{0}', space=smem, size = 0x400, scoped, tag = 'input window, operand 0, single buffered']
    #allocation5 [shape = 's32[2]{0}', space=sflag, size = 0x8, scoped, tag = 'scoped memory for lrw_wer_forward.1']
    #allocation6 [shape = 's32[2]{0}', space=sflag, size = 0x8, scoped, tag = 'scoped memory for lrw_wer_forward.1']
    #allocation7 [shape = 'u8[1024]{0}', space=smem, size = 0x400, scoped, tag = 'input window, operand 1, single buffered']
    #allocation8 [shape = 's32[1]{0}', space=sflag, size = 0x4, scoped, tag = 'scoped memory for lrw_wer_forward.1']
    #allocation9 [shape = 'u8[1024]{0}', space=smem, size = 0x400, scoped, tag = 'input window, operand 2, single buffered']
    #allocation10 [shape = 'u8[1024]{0}', space=smem, size = 0x400, scoped, tag = 'input window, operand 3, single buffered']
    #allocation11 [shape = 's32[1]{0}', space=sflag, size = 0x4, scoped, tag = 'scoped memory for lrw_wer_forward.1']
    #allocation12 [shape = 'u8[65536]{0}', space=vmem, size = 0x10000, scoped, tag = 'input window, operand 8, single buffered']
    %17 = vsyncpa [#allocation6], 0
    %18 = vsyncpa [#allocation8], 0
    %19 = vsyncpa [#allocation11], 0
    %20 = vsyncpa [#allocation5], 0
    loop: start=0, step=1, limit=4
    $region2: #{lrw_wer_forward.1} parent=1 // loop_pre_header
      _
    $region3: #{lrw_wer_forward.1} parent=1 // loop_header
      %s22 = sphi 0, %s26
      %p23 = scmp.ge.s32.totalorder %s22, 4
      %s29 = sphi 0, %s41
      %s30 = sphi 0, %s37
      %s31 = sphi 0, %s29
      %s32 = sphi 0, %s30
      %s33 = sphi 0, %s31
      %s34 = sphi 0, %s32
      %s42 = sphi 0, %s42
      %s44 = sphi 0, %s42
      %s45 = sphi 0, %s44
      %s59 = sphi 0, %s45
      %s63 = sphi 0, %s63
      %s65 = sphi 0, %s63
      %s66 = sphi 0, %s65
      %s80 = sphi 0, %s66
      %s84 = sphi 0, %s84
      %s86 = sphi 0, %s84
      %s87 = sphi 0, %s86
      %s101 = sphi 0, %s87
      %s105 = sphi 0, %s105
      %s107 = sphi 0, %s105
      %s108 = sphi 0, %s107
      %s122 = sphi 0, %s108
      %s130 = sphi 0, %s132
      %s133 = sphi 0, %s130
      %s134 = sphi 0, %s133
      %s150 = sphi 0, %s134
      %s158 = sphi 0, %s160
      %s161 = sphi 0, %s158
      %s162 = sphi 0, %s161
      %s178 = sphi 0, %s162
      %s182 = sphi 0, %s182
      %s184 = sphi 0, %s182
      %s185 = sphi 0, %s184
      %s199 = sphi 0, %s185
      %s203 = sphi 0, %s203
      %s205 = sphi 0, %s203
      %s206 = sphi 0, %s205
      %s220 = sphi 0, %s206
      %s224 = sphi 0, %s224
      %s226 = sphi 0, %s224
      %s227 = sphi 0, %s226
      %s241 = sphi 0, %s227
      %s245 = sphi 0, %s245
      %s247 = sphi 0, %s245
      %s248 = sphi 0, %s247
      %s262 = sphi 0, %s248
      %s268 = sphi 0, %s270
      %s271 = sphi 0, %s268
      %s272 = sphi 0, %s271
      %s288 = sphi 0, %s272
      %s294 = sphi 0, %s296
      %s297 = sphi 0, %s294
      %s298 = sphi 0, %s297
      %s314 = sphi 0, %s298
    $region4: #{lrw_wer_forward.1} parent=1 // loop_header_branch
      %25 = sbr.rel (%p23) target = $region8
    $region5: #{lrw_wer_forward.1} parent=1 // loop_body
      %s27 = ssub.s32 %s22, 1
      %s28 = ssub.s32 %s22, 2
      %s35 = sadd.s32 1, %s30
      %p36 = scmp.ge.s32.totalorder %s35, 1
      %s37 = scalar_select %p36, 0, %s35
      %s38 = sadd.s32 1, %s29
      %s39 = scalar_select %p36, %s38, %s29
      %p40 = scmp.ge.s32.totalorder %s39, 2
      %s41 = scalar_select %p40, 0, %s39
      %s43 = sadd.s32 %s42, 1
      %p46 = scmp.eq.s32.totalorder %s22, 1
      %p47 = scmp.ne.s32.totalorder %s42, %s44
      %p48 = scmp.eq.s32.totalorder %s22, 0
      %p49 = por %p47, %p48
      %p50 = scmp.ne.s32.totalorder %s42, %s44
      %p51 = scmp.eq.s32.totalorder %s27, 1
      %p52 = por %p50, %p51
      %p53 = scmp.ne.s32.totalorder %s44, %s45
      %p54 = scmp.eq.s32.totalorder %s27, 0
      %p55 = por %p53, %p54
      %p56 = scmp.ne.s32.totalorder %s44, %s45
      %p57 = scmp.eq.s32.totalorder %s28, 1
      %p58 = por %p56, %p57
      %p60 = scmp.ne.s32.totalorder %s45, %s59
      %p61 = scmp.eq.s32.totalorder %s28, 0
      %p62 = por %p60, %p61
      %s64 = sadd.s32 %s63, 1
      %p67 = scmp.eq.s32.totalorder %s22, 1
      %p68 = scmp.ne.s32.totalorder %s63, %s65
      %p69 = scmp.eq.s32.totalorder %s22, 0
      %p70 = por %p68, %p69
      %p71 = scmp.ne.s32.totalorder %s63, %s65
      %p72 = scmp.eq.s32.totalorder %s27, 1
      %p73 = por %p71, %p72
      %p74 = scmp.ne.s32.totalorder %s65, %s66
      %p75 = scmp.eq.s32.totalorder %s27, 0
      %p76 = por %p74, %p75
      %p77 = scmp.ne.s32.totalorder %s65, %s66
      %p78 = scmp.eq.s32.totalorder %s28, 1
      %p79 = por %p77, %p78
      %p81 = scmp.ne.s32.totalorder %s66, %s80
      %p82 = scmp.eq.s32.totalorder %s28, 0
      %p83 = por %p81, %p82
      %s85 = sadd.s32 %s84, 1
      %p88 = scmp.eq.s32.totalorder %s22, 1
      %p89 = scmp.ne.s32.totalorder %s84, %s86
      %p90 = scmp.eq.s32.totalorder %s22, 0
      %p91 = por %p89, %p90
      %p92 = scmp.ne.s32.totalorder %s84, %s86
      %p93 = scmp.eq.s32.totalorder %s27, 1
      %p94 = por %p92, %p93
      %p95 = scmp.ne.s32.totalorder %s86, %s87
      %p96 = scmp.eq.s32.totalorder %s27, 0
      %p97 = por %p95, %p96
      %p98 = scmp.ne.s32.totalorder %s86, %s87
      %p99 = scmp.eq.s32.totalorder %s28, 1
      %p100 = por %p98, %p99
      %p102 = scmp.ne.s32.totalorder %s87, %s101
      %p103 = scmp.eq.s32.totalorder %s28, 0
      %p104 = por %p102, %p103
      %s106 = sadd.s32 %s105, 1
      %p109 = scmp.eq.s32.totalorder %s22, 1
      %p110 = scmp.ne.s32.totalorder %s105, %s107
      %p111 = scmp.eq.s32.totalorder %s22, 0
      %p112 = por %p110, %p111
      %p113 = scmp.ne.s32.totalorder %s105, %s107
      %p114 = scmp.eq.s32.totalorder %s27, 1
      %p115 = por %p113, %p114
      %p116 = scmp.ne.s32.totalorder %s107, %s108
      %p117 = scmp.eq.s32.totalorder %s27, 0
      %p118 = por %p116, %p117
      %p119 = scmp.ne.s32.totalorder %s107, %s108
      %p120 = scmp.eq.s32.totalorder %s28, 1
      %p121 = por %p119, %p120
      %p123 = scmp.ne.s32.totalorder %s108, %s122
      %p124 = scmp.eq.s32.totalorder %s28, 0
      %p125 = por %p123, %p124
      %s126 = ssub.s32 %s29, %s41
      %s127 = ssub.s32 %s30, %s37
      %s128 = sor.u32 %s126, %s127
      %p129 = scmp.eq.s32.totalorder %s128, 0
      %s131 = sadd.s32 %s130, 1
      %s132 = scalar_select %p129, %s130, %s131
      %p135 = pneg %p129
      %p136 = scmp.eq.s32.totalorder %s22, 1
      %p137 = por %p135, %p136
      %p138 = scmp.ne.s32.totalorder %s130, %s133
      %p139 = scmp.eq.s32.totalorder %s22, 0
      %p140 = por %p138, %p139
      %p141 = scmp.ne.s32.totalorder %s130, %s133
      %p142 = scmp.eq.s32.totalorder %s27, 1
      %p143 = por %p141, %p142
      %p144 = scmp.ne.s32.totalorder %s133, %s134
      %p145 = scmp.eq.s32.totalorder %s27, 0
      %p146 = por %p144, %p145
      %p147 = scmp.ne.s32.totalorder %s133, %s134
      %p148 = scmp.eq.s32.totalorder %s28, 1
      %p149 = por %p147, %p148
      %p151 = scmp.ne.s32.totalorder %s134, %s150
      %p152 = scmp.eq.s32.totalorder %s28, 0
      %p153 = por %p151, %p152
      %s154 = ssub.s32 %s29, %s41
      %s155 = ssub.s32 %s30, %s37
      %s156 = sor.u32 %s154, %s155
      %p157 = scmp.eq.s32.totalorder %s156, 0
      %s159 = sadd.s32 %s158, 1
      %s160 = scalar_select %p157, %s158, %s159
      %p163 = pneg %p157
      %p164 = scmp.eq.s32.totalorder %s22, 1
      %p165 = por %p163, %p164
      %p166 = scmp.ne.s32.totalorder %s158, %s161
      %p167 = scmp.eq.s32.totalorder %s22, 0
      %p168 = por %p166, %p167
      %p169 = scmp.ne.s32.totalorder %s158, %s161
      %p170 = scmp.eq.s32.totalorder %s27, 1
      %p171 = por %p169, %p170
      %p172 = scmp.ne.s32.totalorder %s161, %s162
      %p173 = scmp.eq.s32.totalorder %s27, 0
      %p174 = por %p172, %p173
      %p175 = scmp.ne.s32.totalorder %s161, %s162
      %p176 = scmp.eq.s32.totalorder %s28, 1
      %p177 = por %p175, %p176
      %p179 = scmp.ne.s32.totalorder %s162, %s178
      %p180 = scmp.eq.s32.totalorder %s28, 0
      %p181 = por %p179, %p180
      %s183 = sadd.s32 %s182, 1
      %p186 = scmp.eq.s32.totalorder %s22, 1
      %p187 = scmp.ne.s32.totalorder %s182, %s184
      %p188 = scmp.eq.s32.totalorder %s22, 0
      %p189 = por %p187, %p188
      %p190 = scmp.ne.s32.totalorder %s182, %s184
      %p191 = scmp.eq.s32.totalorder %s27, 1
      %p192 = por %p190, %p191
      %p193 = scmp.ne.s32.totalorder %s184, %s185
      %p194 = scmp.eq.s32.totalorder %s27, 0
      %p195 = por %p193, %p194
      %p196 = scmp.ne.s32.totalorder %s184, %s185
      %p197 = scmp.eq.s32.totalorder %s28, 1
      %p198 = por %p196, %p197
      %p200 = scmp.ne.s32.totalorder %s185, %s199
      %p201 = scmp.eq.s32.totalorder %s28, 0
      %p202 = por %p200, %p201
      %s204 = sadd.s32 %s203, 1
      %p207 = scmp.eq.s32.totalorder %s22, 1
      %p208 = scmp.ne.s32.totalorder %s203, %s205
      %p209 = scmp.eq.s32.totalorder %s22, 0
      %p210 = por %p208, %p209
      %p211 = scmp.ne.s32.totalorder %s203, %s205
      %p212 = scmp.eq.s32.totalorder %s27, 1
      %p213 = por %p211, %p212
      %p214 = scmp.ne.s32.totalorder %s205, %s206
      %p215 = scmp.eq.s32.totalorder %s27, 0
      %p216 = por %p214, %p215
      %p217 = scmp.ne.s32.totalorder %s205, %s206
      %p218 = scmp.eq.s32.totalorder %s28, 1
      %p219 = por %p217, %p218
      %p221 = scmp.ne.s32.totalorder %s206, %s220
      %p222 = scmp.eq.s32.totalorder %s28, 0
      %p223 = por %p221, %p222
      %s225 = sadd.s32 %s224, 1
      %p228 = scmp.eq.s32.totalorder %s22, 1
      %p229 = scmp.ne.s32.totalorder %s224, %s226
      %p230 = scmp.eq.s32.totalorder %s22, 0
      %p231 = por %p229, %p230
      %p232 = scmp.ne.s32.totalorder %s224, %s226
      %p233 = scmp.eq.s32.totalorder %s27, 1
      %p234 = por %p232, %p233
      %p235 = scmp.ne.s32.totalorder %s226, %s227
      %p236 = scmp.eq.s32.totalorder %s27, 0
      %p237 = por %p235, %p236
      %p238 = scmp.ne.s32.totalorder %s226, %s227
      %p239 = scmp.eq.s32.totalorder %s28, 1
      %p240 = por %p238, %p239
      %p242 = scmp.ne.s32.totalorder %s227, %s241
      %p243 = scmp.eq.s32.totalorder %s28, 0
      %p244 = por %p242, %p243
      %s246 = sadd.s32 %s245, 1
      %p249 = scmp.eq.s32.totalorder %s22, 1
      %p250 = scmp.ne.s32.totalorder %s245, %s247
      %p251 = scmp.eq.s32.totalorder %s22, 0
      %p252 = por %p250, %p251
      %p253 = scmp.ne.s32.totalorder %s245, %s247
      %p254 = scmp.eq.s32.totalorder %s27, 1
      %p255 = por %p253, %p254
      %p256 = scmp.ne.s32.totalorder %s247, %s248
      %p257 = scmp.eq.s32.totalorder %s27, 0
      %p258 = por %p256, %p257
      %p259 = scmp.ne.s32.totalorder %s247, %s248
      %p260 = scmp.eq.s32.totalorder %s28, 1
      %p261 = por %p259, %p260
      %p263 = scmp.ne.s32.totalorder %s248, %s262
      %p264 = scmp.eq.s32.totalorder %s28, 0
      %p265 = por %p263, %p264
      %s266 = ssub.s32 %s29, %s41
      %p267 = scmp.eq.s32.totalorder %s266, 0
      %s269 = sadd.s32 %s268, 1
      %s270 = scalar_select %p267, %s268, %s269
      %p273 = pneg %p267
      %p274 = scmp.eq.s32.totalorder %s22, 1
      %p275 = por %p273, %p274
      %p276 = scmp.ne.s32.totalorder %s268, %s271
      %p277 = scmp.eq.s32.totalorder %s22, 0
      %p278 = por %p276, %p277
      %p279 = scmp.ne.s32.totalorder %s268, %s271
      %p280 = scmp.eq.s32.totalorder %s27, 1
      %p281 = por %p279, %p280
      %p282 = scmp.ne.s32.totalorder %s271, %s272
      %p283 = scmp.eq.s32.totalorder %s27, 0
      %p284 = por %p282, %p283
      %p285 = scmp.ne.s32.totalorder %s271, %s272
      %p286 = scmp.eq.s32.totalorder %s28, 1
      %p287 = por %p285, %p286
      %p289 = scmp.ne.s32.totalorder %s272, %s288
      %p290 = scmp.eq.s32.totalorder %s28, 0
      %p291 = por %p289, %p290
      %s292 = ssub.s32 %s29, %s41
      %p293 = scmp.eq.s32.totalorder %s292, 0
      %s295 = sadd.s32 %s294, 1
      %s296 = scalar_select %p293, %s294, %s295
      %p299 = pneg %p293
      %p300 = scmp.eq.s32.totalorder %s22, 1
      %p301 = por %p299, %p300
      %p302 = scmp.ne.s32.totalorder %s294, %s297
      %p303 = scmp.eq.s32.totalorder %s22, 0
      %p304 = por %p302, %p303
      %p305 = scmp.ne.s32.totalorder %s294, %s297
      %p306 = scmp.eq.s32.totalorder %s27, 1
      %p307 = por %p305, %p306
      %p308 = scmp.ne.s32.totalorder %s297, %s298
      %p309 = scmp.eq.s32.totalorder %s27, 0
      %p310 = por %p308, %p309
      %p311 = scmp.ne.s32.totalorder %s297, %s298
      %p312 = scmp.eq.s32.totalorder %s28, 1
      %p313 = por %p311, %p312
      %p315 = scmp.ne.s32.totalorder %s298, %s314
      %p316 = scmp.eq.s32.totalorder %s28, 0
      %p317 = por %p315, %p316
      %p318 = scmp.le.s32.totalorder 1, %s22
      %p319 = scmp.lt.s32.totalorder %s22, 3
      %p320 = pnand %p318, %p319
      %p321 = pneg %p320
      // Predicated region
      $region9: #{lrw_wer_forward.1} parent=5 // pred_check
        _
      $region10: #{lrw_wer_forward.1} parent=5 // pred_check_branch
        %323 = sbr.rel (%p320) target = $region12
      $region11: #{lrw_wer_forward.1} parent=5 // pred_region
        %s324 = ssub.s32 %s22, 1
        // Predicated region
        $region13: #{lrw_wer_forward.1} parent=11 // pred_check
          %p325 = pneg %p55
        $region14: #{lrw_wer_forward.1} parent=11 // pred_check_branch
          %327 = sbr.rel (%p325) target = $region16
        $region15: #{lrw_wer_forward.1} parent=11 // pred_region
          %s329 = ssub.s32 32, 32
          %330 = vsyncadd [#allocation6], %s329
          %s332 = sshll.u32 %s0, 4
          %s333 = int_to_ptr.vmem [resolvable:$true] %s332
          %335 = dma.vmem_to_smem %s333, 32, [#allocation4], [#allocation6]
        $region16: #{lrw_wer_forward.1} parent=11 // pred_fallthru
          _
        // Predicated region
        $region17: #{lrw_wer_forward.1} parent=11 // pred_check
          %p336 = pneg %p76
        $region18: #{lrw_wer_forward.1} parent=11 // pred_check_branch
          %338 = sbr.rel (%p336) target = $region20
        $region19: #{lrw_wer_forward.1} parent=11 // pred_region
          %s340 = ssub.s32 32, 32
          %341 = vsyncadd [#allocation8], %s340
          %s343 = sshll.u32 %s1, 4
          %s344 = int_to_ptr.vmem [resolvable:$true] %s343
          %346 = dma.vmem_to_smem %s344, 32, [#allocation7], [#allocation8]
        $region20: #{lrw_wer_forward.1} parent=11 // pred_fallthru
          _
        // Predicated region
        $region21: #{lrw_wer_forward.1} parent=11 // pred_check
          %p347 = pneg %p97
        $region22: #{lrw_wer_forward.1} parent=11 // pred_check_branch
          %349 = sbr.rel (%p347) target = $region24
        $region23: #{lrw_wer_forward.1} parent=11 // pred_region
          %s351 = ssub.s32 32, 32
          %352 = vsyncadd [#allocation8], %s351
          %s354 = sshll.u32 %s2, 4
          %s355 = int_to_ptr.vmem [resolvable:$true] %s354
          %357 = dma.vmem_to_smem %s355, 32, [#allocation9], [#allocation8]
        $region24: #{lrw_wer_forward.1} parent=11 // pred_fallthru
          _
        // Predicated region
        $region25: #{lrw_wer_forward.1} parent=11 // pred_check
          %p358 = pneg %p118
        $region26: #{lrw_wer_forward.1} parent=11 // pred_check_branch
          %360 = sbr.rel (%p358) target = $region28
        $region27: #{lrw_wer_forward.1} parent=11 // pred_region
          %s362 = ssub.s32 32, 32
          %363 = vsyncadd [#allocation11], %s362
          %s365 = sshll.u32 %s3, 4
          %s366 = int_to_ptr.vmem [resolvable:$true] %s365
          %368 = dma.vmem_to_smem %s366, 32, [#allocation10], [#allocation11]
        $region28: #{lrw_wer_forward.1} parent=11 // pred_fallthru
          _
        // Predicated region
        $region29: #{lrw_wer_forward.1} parent=11 // pred_check
          %p369 = pneg %p195
        $region30: #{lrw_wer_forward.1} parent=11 // pred_check_branch
          %371 = sbr.rel (%p369) target = $region32
        $region31: #{lrw_wer_forward.1} parent=11 // pred_region
          _
        $region32: #{lrw_wer_forward.1} parent=11 // pred_fallthru
          _
        // Predicated region
        $region33: #{lrw_wer_forward.1} parent=11 // pred_check
          %p372 = pneg %p216
        $region34: #{lrw_wer_forward.1} parent=11 // pred_check_branch
          %374 = sbr.rel (%p372) target = $region36
        $region35: #{lrw_wer_forward.1} parent=11 // pred_region
          _
        $region36: #{lrw_wer_forward.1} parent=11 // pred_fallthru
          _
        // Predicated region
        $region37: #{lrw_wer_forward.1} parent=11 // pred_check
          %p375 = pneg %p237
        $region38: #{lrw_wer_forward.1} parent=11 // pred_check_branch
          %377 = sbr.rel (%p375) target = $region40
        $region39: #{lrw_wer_forward.1} parent=11 // pred_region
          %s379 = ssub.s32 2048, 2048
          %380 = vsyncadd [#allocation5], %s379
          %s381 = sshll.u32 [#allocation12], 4
          %s382 = int_to_ptr.vmem [resolvable:$true] %s381
          %387 = dma.hbm_to_vmem [thread:$0]  %s8, 2048, %s382, [#allocation5], 128, 128, 8
        $region40: #{lrw_wer_forward.1} parent=11 // pred_fallthru
          _
        // Predicated region
        $region41: #{lrw_wer_forward.1} parent=11 // pred_check
          %p388 = pneg %p258
        $region42: #{lrw_wer_forward.1} parent=11 // pred_check_branch
          %390 = sbr.rel (%p388) target = $region44
        $region43: #{lrw_wer_forward.1} parent=11 // pred_region
          _
        $region44: #{lrw_wer_forward.1} parent=11 // pred_fallthru
          _
      $region12: #{lrw_wer_forward.1} parent=5 // pred_fallthru
        _
      %p391 = scmp.lt.s32.totalorder %s22, 2
      // Predicated region
      $region45: #{lrw_wer_forward.1} parent=5 // pred_check
        %p392 = pneg %p391
      $region46: #{lrw_wer_forward.1} parent=5 // pred_check_branch
        %394 = sbr.rel (%p392) target = $region48
      $region47: #{lrw_wer_forward.1} parent=5 // pred_region
        // Predicated region
        $region49: #{lrw_wer_forward.1} parent=47 // pred_check
          %p395 = pneg %p140
        $region50: #{lrw_wer_forward.1} parent=47 // pred_check_branch
          %397 = sbr.rel (%p395) target = $region52
        $region51: #{lrw_wer_forward.1} parent=47 // pred_region
          %p398 = scmp.lt.s32.totalorder %s29, 1
          %s399 = scalar_select %p398, %s29, 1
          %p400 = scmp.lt.s32.totalorder %s30, 0
          %s401 = scalar_select %p400, %s30, 0
          %s402 = smul.addr %s401, 5
          %s403 = smul.addr %s399, 5
          %s404 = sadd.s32 %s402, %s403
          %s405 = smul.addr %s404, 2
          %s406 = scalar_lea.vmem %s4, %s405
        $region52: #{lrw_wer_forward.1} parent=47 // pred_fallthru
          _
        // Predicated region
        $region53: #{lrw_wer_forward.1} parent=47 // pred_check
          %p407 = pneg %p168
        $region54: #{lrw_wer_forward.1} parent=47 // pred_check_branch
          %409 = sbr.rel (%p407) target = $region56
        $region55: #{lrw_wer_forward.1} parent=47 // pred_region
          %p410 = scmp.lt.s32.totalorder %s29, 1
          %s411 = scalar_select %p410, %s29, 1
          %p412 = scmp.lt.s32.totalorder %s30, 0
          %s413 = scalar_select %p412, %s30, 0
          %s414 = smul.addr %s413, 5
          %s415 = smul.addr %s411, 5
          %s416 = sadd.s32 %s414, %s415
          %s417 = smul.addr %s416, 2
          %s418 = scalar_lea.vmem %s5, %s417
        $region56: #{lrw_wer_forward.1} parent=47 // pred_fallthru
          _
      $region48: #{lrw_wer_forward.1} parent=5 // pred_fallthru
        _
      %p419 = scmp.le.s32.totalorder 1, %s22
      %p420 = scmp.lt.s32.totalorder %s22, 3
      %p421 = pnand %p419, %p420
      %p422 = pneg %p421
      // Predicated region
      $region57: #{lrw_wer_forward.1} parent=5 // pred_check
        _
      $region58: #{lrw_wer_forward.1} parent=5 // pred_check_branch
        %424 = sbr.rel (%p421) target = $region60
      $region59: #{lrw_wer_forward.1} parent=5 // pred_region
        %s425 = ssub.s32 %s22, 1
        // Predicated region
        $region61: #{lrw_wer_forward.1} parent=59 // pred_check
          %p426 = pneg %p55
        $region62: #{lrw_wer_forward.1} parent=59 // pred_check_branch
          %428 = sbr.rel (%p426) target = $region64
        $region63: #{lrw_wer_forward.1} parent=59 // pred_region
          %429 = dma.done [#allocation6], 32
        $region64: #{lrw_wer_forward.1} parent=59 // pred_fallthru
          _
        // Predicated region
        $region65: #{lrw_wer_forward.1} parent=59 // pred_check
          %p430 = pneg %p76
        $region66: #{lrw_wer_forward.1} parent=59 // pred_check_branch
          %432 = sbr.rel (%p430) target = $region68
        $region67: #{lrw_wer_forward.1} parent=59 // pred_region
          %433 = dma.done [#allocation8], 32
        $region68: #{lrw_wer_forward.1} parent=59 // pred_fallthru
          _
        // Predicated region
        $region69: #{lrw_wer_forward.1} parent=59 // pred_check
          %p434 = pneg %p97
        $region70: #{lrw_wer_forward.1} parent=59 // pred_check_branch
          %436 = sbr.rel (%p434) target = $region72
        $region71: #{lrw_wer_forward.1} parent=59 // pred_region
          %437 = dma.done [#allocation8], 32
        $region72: #{lrw_wer_forward.1} parent=59 // pred_fallthru
          _
        // Predicated region
        $region73: #{lrw_wer_forward.1} parent=59 // pred_check
          %p438 = pneg %p118
        $region74: #{lrw_wer_forward.1} parent=59 // pred_check_branch
          %440 = sbr.rel (%p438) target = $region76
        $region75: #{lrw_wer_forward.1} parent=59 // pred_region
          %441 = dma.done [#allocation11], 32
        $region76: #{lrw_wer_forward.1} parent=59 // pred_fallthru
          _
        // Predicated region
        $region77: #{lrw_wer_forward.1} parent=59 // pred_check
          %p442 = pneg %p237
        $region78: #{lrw_wer_forward.1} parent=59 // pred_check_branch
          %444 = sbr.rel (%p442) target = $region80
        $region79: #{lrw_wer_forward.1} parent=59 // pred_region
          %445 = dma.done [#allocation5], 2048
        $region80: #{lrw_wer_forward.1} parent=59 // pred_fallthru
          _
        %446 = sfence
        %p447 = pneg %p55
        %p448 = pneg %p52
        %p449 = pneg %p76
        %p450 = pneg %p73
        %p451 = pneg %p97
        %p452 = pneg %p94
        %p453 = pneg %p118
        %p454 = pneg %p115
        %p455 = scmp.lt.s32.totalorder %s31, 1
        %s456 = scalar_select %p455, %s31, 1
        %p457 = scmp.lt.s32.totalorder %s32, 0
        %s458 = scalar_select %p457, %s32, 0
        %s459 = smul.addr %s458, 5
        %s460 = smul.addr %s456, 5
        %s461 = sadd.s32 %s459, %s460
        %s462 = smul.addr %s461, 2
        %s463 = scalar_lea.vmem %s4, %s462
        %p464 = pneg %p146
        %p465 = pneg %p143
        %p466 = scmp.lt.s32.totalorder %s31, 1
        %s467 = scalar_select %p466, %s31, 1
        %p468 = scmp.lt.s32.totalorder %s32, 0
        %s469 = scalar_select %p468, %s32, 0
        %s470 = smul.addr %s469, 5
        %s471 = smul.addr %s467, 5
        %s472 = sadd.s32 %s470, %s471
        %s473 = smul.addr %s472, 2
        %s474 = scalar_lea.vmem %s5, %s473
        %p475 = pneg %p174
        %p476 = pneg %p171
        %p477 = pneg %p195
        %p478 = pneg %p192
        %p479 = pneg %p216
        %p480 = pneg %p213
        %p481 = pneg %p237
        %p482 = pneg %p234
        %p483 = pneg %p258
        %p484 = pneg %p255
        %p485 = pneg %p284
        %p486 = pneg %p281
        %p487 = scmp.lt.s32.totalorder %s31, 1
        %s488 = scalar_select %p487, %s31, 1
        %s489 = scalar_lea.vmem %s10, %s488
        %p490 = pneg %p310
        %p491 = pneg %p307
        %p492 = scmp.lt.s32.totalorder %s31, 1
        %s493 = scalar_select %p492, %s31, 1
        %s494 = scalar_lea.vmem %s11, %s493
        %p495 = scmp.lt.s32.totalorder %s31, 1
        %s496 = scalar_select %p495, %s31, 1
        %p497 = scmp.lt.s32.totalorder %s32, 0
        %s498 = scalar_select %p497, %s32, 0
        %s499 = smul.addr %s498, 5
        %s500 = smul.addr %s496, 5
        %s501 = sadd.s32 %s499, %s500
        %s502 = smul.addr %s501, 2
        %s503 = scalar_lea.vmem %s4, %s502
        %p504 = scmp.lt.s32.totalorder %s31, 1
        %s505 = scalar_select %p504, %s31, 1
        %p506 = scmp.lt.s32.totalorder %s32, 0
        %s507 = scalar_select %p506, %s32, 0
        %s508 = smul.addr %s507, 5
        %s509 = smul.addr %s505, 5
        %s510 = sadd.s32 %s508, %s509
        %s511 = smul.addr %s510, 2
        %s512 = scalar_lea.vmem %s5, %s511
        %p513 = scmp.lt.s32.totalorder %s31, 1
        %s514 = scalar_select %p513, %s31, 1
        %s515 = scalar_lea.vmem %s10, %s514
        %p516 = scmp.lt.s32.totalorder %s31, 1
        %s517 = scalar_select %p516, %s31, 1
        %s518 = scalar_lea.vmem %s11, %s517
        %p520 = scmp.eq.s32.totalorder %s32, 0
        // Predicated region
        $region81: #{lrw_wer_forward.1} parent=59 // pred_check
          %p521 = pneg %p520
        $region82: #{lrw_wer_forward.1} parent=59 // pred_check_branch
          %523 = sbr.rel (%p521) target = $region84
        $region83: #{lrw_wer_forward.1} parent=59 // pred_region
          %524 = vst [vmem:[#allocation2] sm:$0x1] 0.0
          %525 = vst [vmem:[#allocation3] sm:$0x1] 0.0
        $region84: #{lrw_wer_forward.1} parent=59 // pred_fallthru
          _
        %v526 = vld [vmem:[%s503] sm:$0xff]
        %v527 = vld [vmem:[%s503 + $0x8] sm:$0x3]
        %s528 = smul.u32 %s31, 128
        %s529 = sld [smem:[#allocation4 + %s528]]
        %v530 = vstv %s529
        %v531 = vsub.f32 %v526, %v530
        %v532 = vsub.f32 %v527, %v530
        %s533 = sld [smem:[#allocation7 + %s528]]
        %v534 = vstv %s533
        %v535 = vmul.f32 %v531, %v534
        %v536 = vmul.f32 %v532, %v534
        %v537 = vld [vmem:[%s512] sm:$0xff]
        %v538 = vld [vmem:[%s512 + $0x8] sm:$0x3]
        %s539 = sld [smem:[#allocation9 + %s528]]
        %v540 = vstv %s539
        %v541 = vsub.f32 %v537, %v540
        %v542 = vsub.f32 %v538, %v540
        %s543 = sld [smem:[#allocation10 + %s528]]
        %v544 = vstv %s543
        %v545 = vmul.f32 %v541, %v544
        %v546 = vmul.f32 %v542, %v544
        %v549 = vcombine.high %v535, %v535
        %v551 = vunpack.c.l.s4 1983009808
        %v552 = vunpack.c.0.s8 %v551
        %v553 = vlaneseq
        %v554 = vshrl.u32 %v553, 7
        %v555 = vsub.s32 %v552, %v554
        %v556 = vrot.slane %v535, %v555
        %v558 = vunpack.c.l.s4 1983009808
        %v559 = vunpack.c.0.s8 %v558
        %v560 = vlaneseq
        %v561 = vshrl.u32 %v560, 7
        %v562 = vsub.s32 %v559, %v561
        %v563 = vrot.slane %v549, %v562
        %v564 = vcombine.high %v556, %v556
        %v565 = vcombine.high %v563, %v563
        %v567 = vunpack.c.l.s4 1983009808
        %v568 = vunpack.c.0.s8 %v567
        %v569 = vlaneseq
        %v570 = vshrl.u32 %v569, 7
        %v571 = vsub.s32 %v568, %v570
        %v572 = vrot.slane %v536, %v571
        %v580 = vcombine.low %v545, %v545
        %v582 = vunpack.c.l.s4 1983009808
        %v583 = vunpack.c.0.s8 %v582
        %v584 = vlaneseq
        %v585 = vshrl.u32 %v584, 7
        %v586 = vsub.s32 %v583, %v585
        %v587 = vrot.slane %v580, %v586
        %v589 = vunpack.c.l.s4 1983009808
        %v590 = vunpack.c.0.s8 %v589
        %v591 = vlaneseq
        %v592 = vshrl.u32 %v591, 7
        %v593 = vsub.s32 %v590, %v592
        %v594 = vrot.slane %v545, %v593
        %v595 = vcombine.high %v587, %v587
        %v596 = vcombine.high %v594, %v594
        %v597 = vcombine.low %v546, %v546
        %v599 = vunpack.c.l.s4 1983009808
        %v600 = vunpack.c.0.s8 %v599
        %v601 = vlaneseq
        %v602 = vshrl.u32 %v601, 7
        %v603 = vsub.s32 %v600, %v602
        %v604 = vrot.slane %v597, %v603
        %vm610 = vcmask 1041408
        %v611 = vsel %vm610, %v556, %v587
        %v612 = vsel %vm610, %v564, %v595
        %v613 = vsel %vm610, %v563, %v594
        %v614 = vsel %vm610, %v565, %v596
        %v615 = vsel %vm610, %v572, %v604
        %v616 = vpack.c.bf16 %v611, %v611
        %v617 = vpack.c.bf16 %v612, %v612
        %v618 = vpack.c.bf16 %v613, %v613
        %v619 = vpack.c.bf16 %v614, %v614
        %v620 = vpack.c.bf16 %v615, %v615
        %v621 = vld [vmem:[%s6] sm:$0xf]
        %v622 = vld [vmem:[%s6 + $0x4] sm:$0xf]
        %v623 = vld [vmem:[%s6 + $0x8] sm:$0xf]
        %v624 = vld [vmem:[%s6 + $0xc] sm:$0xf]
        %v625 = vld [vmem:[%s6 + $0x10] sm:$0xf]
        %v626 = vld [vmem:[%s6 + $0x14] sm:$0xf]
        %v627 = vld [vmem:[%s6 + $0x18] sm:$0xf]
        %v628 = vld [vmem:[%s6 + $0x1c] sm:$0xf]
        %v629 = vld [vmem:[%s6 + $0x20] sm:$0xf]
        %v630 = vld [vmem:[%s6 + $0x24] sm:$0xf]
        %v631 = vld [vmem:[%s6 + $0x28] sm:$0xf]
        %v632 = vld [vmem:[%s6 + $0x2c] sm:$0xf]
        %v633 = vld [vmem:[%s6 + $0x30] sm:$0xf]
        %v634 = vld [vmem:[%s6 + $0x34] sm:$0xf]
        %v635 = vld [vmem:[%s6 + $0x38] sm:$0xf]
        %v636 = vld [vmem:[%s6 + $0x3c] sm:$0xf]
        %v637 = vld [vmem:[%s6 + $0x40] sm:$0xf]
        %v638 = vld [vmem:[%s6 + $0x44] sm:$0xf]
        %v639 = vld [vmem:[%s6 + $0x48] sm:$0xf]
        %v640 = vld [vmem:[%s6 + $0x4c] sm:$0xf]
        %v641 = vld [vmem:[%s6 + $0x50] sm:$0xf]
        %v642 = vld [vmem:[%s6 + $0x54] sm:$0xf]
        %v643 = vld [vmem:[%s6 + $0x58] sm:$0xf]
        %v644 = vld [vmem:[%s6 + $0x5c] sm:$0xf]
        %v645 = vld [vmem:[%s6 + $0x60] sm:$0xf]
        %v646 = vld [vmem:[%s6 + $0x64] sm:$0xf]
        %v647 = vld [vmem:[%s6 + $0x68] sm:$0xf]
        %v648 = vld [vmem:[%s6 + $0x6c] sm:$0xf]
        %v649 = vld [vmem:[%s6 + $0x70] sm:$0xf]
        %v650 = vld [vmem:[%s6 + $0x74] sm:$0xf]
        %v651 = vld [vmem:[%s6 + $0x78] sm:$0xf]
        %v652 = vld [vmem:[%s6 + $0x7c] sm:$0xf]
        %v653 = vld [vmem:[%s6 + $0x80] sm:$0xf]
        %v654 = vld [vmem:[%s6 + $0x84] sm:$0xf]
        %v655 = vld [vmem:[%s6 + $0x88] sm:$0xf]
        %v656 = vld [vmem:[%s6 + $0x8c] sm:$0xf]
        %v657 = vld [vmem:[%s6 + $0x90] sm:$0xf]
        %v658 = vld [vmem:[%s6 + $0x94] sm:$0xf]
        %v659 = vld [vmem:[%s6 + $0x98] sm:$0xf]
        %v660 = vld [vmem:[%s6 + $0x9c] sm:$0xf]
        %v661 = vld [vmem:[%s6 + $0xa0] sm:$0xf]
        %v662 = vld [vmem:[%s6 + $0xa4] sm:$0xf]
        %v663 = vld [vmem:[%s6 + $0xa8] sm:$0xf]
        %v664 = vld [vmem:[%s6 + $0xac] sm:$0xf]
        %v665 = vld [vmem:[%s6 + $0xb0] sm:$0xf]
        %v666 = vld [vmem:[%s6 + $0xb4] sm:$0xf]
        %v667 = vld [vmem:[%s6 + $0xb8] sm:$0xf]
        %v668 = vld [vmem:[%s6 + $0xbc] sm:$0xf]
        %v669 = vld [vmem:[%s6 + $0xc0] sm:$0xf]
        %v670 = vld [vmem:[%s6 + $0xc4] sm:$0xf]
        %v671 = vld [vmem:[%s6 + $0xc8] sm:$0xf]
        %v672 = vld [vmem:[%s6 + $0xcc] sm:$0xf]
        %v673 = vld [vmem:[%s6 + $0xd0] sm:$0xf]
        %v674 = vld [vmem:[%s6 + $0xd4] sm:$0xf]
        %v675 = vld [vmem:[%s6 + $0xd8] sm:$0xf]
        %v676 = vld [vmem:[%s6 + $0xdc] sm:$0xf]
        %v677 = vld [vmem:[%s6 + $0xe0] sm:$0xf]
        %v678 = vld [vmem:[%s6 + $0xe4] sm:$0xf]
        %v679 = vld [vmem:[%s6 + $0xe8] sm:$0xf]
        %v680 = vld [vmem:[%s6 + $0xec] sm:$0xf]
        %v681 = vld [vmem:[%s6 + $0xf0] sm:$0xf]
        %v682 = vld [vmem:[%s6 + $0xf4] sm:$0xf]
        %v683 = vld [vmem:[%s6 + $0xf8] sm:$0xf]
        %v684 = vld [vmem:[%s6 + $0xfc] sm:$0xf]
        %v685 = vld [vmem:[%s6 + $0x100] sm:$0xf]
        %v686 = vld [vmem:[%s6 + $0x104] sm:$0xf]
        %v687 = vld [vmem:[%s6 + $0x108] sm:$0xf]
        %v688 = vld [vmem:[%s6 + $0x10c] sm:$0xf]
        %v689 = vld [vmem:[%s6 + $0x110] sm:$0xf]
        %v690 = vld [vmem:[%s6 + $0x114] sm:$0xf]
        %v691 = vld [vmem:[%s6 + $0x118] sm:$0xf]
        %v692 = vld [vmem:[%s6 + $0x11c] sm:$0xf]
        %v693 = vld [vmem:[%s6 + $0x120] sm:$0xf]
        %v694 = vld [vmem:[%s6 + $0x124] sm:$0xf]
        %v695 = vld [vmem:[%s6 + $0x128] sm:$0xf]
        %v696 = vld [vmem:[%s6 + $0x12c] sm:$0xf]
        %v697 = vld [vmem:[%s6 + $0x130] sm:$0xf]
        %v698 = vld [vmem:[%s6 + $0x134] sm:$0xf]
        %v699 = vld [vmem:[%s6 + $0x138] sm:$0xf]
        %v700 = vld [vmem:[%s6 + $0x13c] sm:$0xf]
        %v701 = vld [vmem:[%s7] sm:$0x1]
        %v703 = vlaneseq
        %v704 = vshrl.u32 %v703, 7
        %v705 = vsub.s32 0, %v704
        %v706 = vrot.slane %v701, %v705
        %v788 = vunpack.c.l.b16 %v621
        %v789 = vunpack.c.l.b16 %v622
        %v790 = vunpack.c.l.b16 %v623
        %v791 = vunpack.c.l.b16 %v624
        %v792 = vunpack.c.l.b16 %v625
        %v793 = vunpack.c.l.b16 %v626
        %v794 = vunpack.c.l.b16 %v627
        %v795 = vunpack.c.l.b16 %v628
        %v796 = vunpack.c.l.b16 %v629
        %v797 = vunpack.c.l.b16 %v630
        %v798 = vunpack.c.l.b16 %v631
        %v799 = vunpack.c.l.b16 %v632
        %v800 = vunpack.c.l.b16 %v633
        %v801 = vunpack.c.l.b16 %v634
        %v802 = vunpack.c.l.b16 %v635
        %v803 = vunpack.c.l.b16 %v636
        %v804 = vunpack.c.l.b16 %v637
        %v805 = vunpack.c.l.b16 %v638
        %v806 = vunpack.c.l.b16 %v639
        %v807 = vunpack.c.l.b16 %v640
        %v808 = vunpack.c.l.b16 %v641
        %v809 = vunpack.c.l.b16 %v642
        %v810 = vunpack.c.l.b16 %v643
        %v811 = vunpack.c.l.b16 %v644
        %v812 = vunpack.c.l.b16 %v645
        %v813 = vunpack.c.l.b16 %v646
        %v814 = vunpack.c.l.b16 %v647
        %v815 = vunpack.c.l.b16 %v648
        %v816 = vunpack.c.l.b16 %v649
        %v817 = vunpack.c.l.b16 %v650
        %v818 = vunpack.c.l.b16 %v651
        %v819 = vunpack.c.l.b16 %v652
        %v820 = vunpack.c.l.b16 %v653
        %v821 = vunpack.c.l.b16 %v654
        %v822 = vunpack.c.l.b16 %v655
        %v823 = vunpack.c.l.b16 %v656
        %v824 = vunpack.c.l.b16 %v657
        %v825 = vunpack.c.l.b16 %v658
        %v826 = vunpack.c.l.b16 %v659
        %v827 = vunpack.c.l.b16 %v660
        %v828 = vunpack.c.l.b16 %v661
        %v829 = vunpack.c.l.b16 %v662
        %v830 = vunpack.c.l.b16 %v663
        %v831 = vunpack.c.l.b16 %v664
        %v832 = vunpack.c.l.b16 %v665
        %v833 = vunpack.c.l.b16 %v666
        %v834 = vunpack.c.l.b16 %v667
        %v835 = vunpack.c.l.b16 %v668
        %v836 = vunpack.c.l.b16 %v669
        %v837 = vunpack.c.l.b16 %v670
        %v838 = vunpack.c.l.b16 %v671
        %v839 = vunpack.c.l.b16 %v672
        %v840 = vunpack.c.l.b16 %v673
        %v841 = vunpack.c.l.b16 %v674
        %v842 = vunpack.c.l.b16 %v675
        %v843 = vunpack.c.l.b16 %v676
        %v844 = vunpack.c.l.b16 %v677
        %v845 = vunpack.c.l.b16 %v678
        %v846 = vunpack.c.l.b16 %v679
        %v847 = vunpack.c.l.b16 %v680
        %v848 = vunpack.c.l.b16 %v681
        %v849 = vunpack.c.l.b16 %v682
        %v850 = vunpack.c.l.b16 %v683
        %v851 = vunpack.c.l.b16 %v684
        %v852 = vunpack.c.l.b16 %v685
        %v853 = vunpack.c.l.b16 %v686
        %v854 = vunpack.c.l.b16 %v687
        %v855 = vunpack.c.l.b16 %v688
        %v856 = vunpack.c.l.b16 %v689
        %v857 = vunpack.c.l.b16 %v690
        %v858 = vunpack.c.l.b16 %v691
        %v859 = vunpack.c.l.b16 %v692
        %v860 = vunpack.c.l.b16 %v693
        %v861 = vunpack.c.l.b16 %v694
        %v862 = vunpack.c.l.b16 %v695
        %v863 = vunpack.c.l.b16 %v696
        %v864 = vunpack.c.l.b16 %v697
        %v865 = vunpack.c.l.b16 %v698
        %v866 = vunpack.c.l.b16 %v699
        %v867 = vunpack.c.l.b16 %v700
        %v868 = vpack.c.b16 %v789, %v788
        %v869 = vpack.c.b16 %v791, %v790
        %v870 = vpack.c.b16 %v793, %v792
        %v871 = vpack.c.b16 %v795, %v794
        %v872 = vpack.c.b16 %v797, %v796
        %v873 = vpack.c.b16 %v799, %v798
        %v874 = vpack.c.b16 %v801, %v800
        %v875 = vpack.c.b16 %v803, %v802
        %v876 = vpack.c.b16 %v805, %v804
        %v877 = vpack.c.b16 %v807, %v806
        %v878 = vpack.c.b16 %v809, %v808
        %v879 = vpack.c.b16 %v811, %v810
        %v880 = vpack.c.b16 %v813, %v812
        %v881 = vpack.c.b16 %v815, %v814
        %v882 = vpack.c.b16 %v817, %v816
        %v883 = vpack.c.b16 %v819, %v818
        %v884 = vpack.c.b16 %v821, %v820
        %v885 = vpack.c.b16 %v823, %v822
        %v886 = vpack.c.b16 %v825, %v824
        %v887 = vpack.c.b16 %v827, %v826
        %v888 = vpack.c.b16 %v829, %v828
        %v889 = vpack.c.b16 %v831, %v830
        %v890 = vpack.c.b16 %v833, %v832
        %v891 = vpack.c.b16 %v835, %v834
        %v892 = vpack.c.b16 %v837, %v836
        %v893 = vpack.c.b16 %v839, %v838
        %v894 = vpack.c.b16 %v841, %v840
        %v895 = vpack.c.b16 %v843, %v842
        %v896 = vpack.c.b16 %v845, %v844
        %v897 = vpack.c.b16 %v847, %v846
        %v898 = vpack.c.b16 %v849, %v848
        %v899 = vpack.c.b16 %v851, %v850
        %v900 = vpack.c.b16 %v853, %v852
        %v901 = vpack.c.b16 %v855, %v854
        %v902 = vpack.c.b16 %v857, %v856
        %v903 = vpack.c.b16 %v859, %v858
        %v904 = vpack.c.b16 %v861, %v860
        %v905 = vpack.c.b16 %v863, %v862
        %v906 = vpack.c.b16 %v865, %v864
        %v907 = vpack.c.b16 %v867, %v866
        %948 = vmatprep.subr.bf16.mxu0 0
        %949 = vmatpush1.bf16.msra.mxu0 %v868
        %950 = vmatprep.subr.bf16.mxu0 0
        %951 = vmatpush1.bf16.msra.mxu0 %v869
        %952 = vmatprep.subr.bf16.mxu0 0
        %953 = vmatpush1.bf16.msra.mxu0 %v870
        %954 = vmatprep.subr.bf16.mxu0 0
        %955 = vmatpush1.bf16.msra.mxu0 %v871
        %956 = vmatprep.subr.bf16.mxu0 0
        %957 = vmatpush1.bf16.msra.mxu0 %v872
        %958 = vmatprep.subr.bf16.mxu0 0
        %959 = vmatpush1.bf16.msra.mxu0 %v873
        %960 = vmatprep.subr.bf16.mxu0 0
        %961 = vmatpush1.bf16.msra.mxu0 %v874
        %962 = vmatprep.subr.bf16.mxu0 0
        %963 = vmatpush1.bf16.msra.mxu0 %v875
        %964 = vmatprep.subr.bf16.mxu0 0
        %965 = vmatpush1.bf16.msra.mxu0 %v876
        %966 = vmatprep.subr.bf16.mxu0 0
        %967 = vmatpush1.bf16.msra.mxu0 %v877
        %968 = vmatprep.subr.bf16.mxu0 0
        %969 = vmatpush1.bf16.msra.mxu0 %v878
        %970 = vmatprep.subr.bf16.mxu0 0
        %971 = vmatpush1.bf16.msra.mxu0 %v879
        %972 = vmatprep.subr.bf16.mxu0 0
        %973 = vmatpush1.bf16.msra.mxu0 %v880
        %974 = vmatprep.subr.bf16.mxu0 0
        %975 = vmatpush1.bf16.msra.mxu0 %v881
        %976 = vmatprep.subr.bf16.mxu0 0
        %977 = vmatpush1.bf16.msra.mxu0 %v882
        %978 = vmatprep.subr.bf16.mxu0 0
        %979 = vmatpush1.bf16.msra.mxu0 %v883
        %980 = vmatprep.mubr.bf16.mxu0 %v617
        %981 = vmatmul.mubr.bf16.gmra.mrb[0].mxu0 %v616
        %v982 = vpop.f32.mrb[0].mxu0
        %v983 = vadd.f32 %v706, %v982
        %v984 = vpop.f32.mrb[0].mxu0
        %v985 = vpop.f32.mrb[0].mxu0
        %v986 = vpop.f32.mrb[0].mxu0
        %987 = vdwg.mxu0
        %988 = vmatprep.subr.bf16.mxu0 0
        %989 = vmatpush1.bf16.msra.mxu0 %v884
        %990 = vmatprep.subr.bf16.mxu0 0
        %991 = vmatpush1.bf16.msra.mxu0 %v885
        %992 = vmatprep.subr.bf16.mxu0 0
        %993 = vmatpush1.bf16.msra.mxu0 %v886
        %994 = vmatprep.subr.bf16.mxu0 0
        %995 = vmatpush1.bf16.msra.mxu0 %v887
        %996 = vmatprep.subr.bf16.mxu0 0
        %997 = vmatpush1.bf16.msra.mxu0 %v888
        %998 = vmatprep.subr.bf16.mxu0 0
        %999 = vmatpush1.bf16.msra.mxu0 %v889
        %1000 = vmatprep.subr.bf16.mxu0 0
        %1001 = vmatpush1.bf16.msra.mxu0 %v890
        %1002 = vmatprep.subr.bf16.mxu0 0
        %1003 = vmatpush1.bf16.msra.mxu0 %v891
        %1004 = vmatprep.subr.bf16.mxu0 0
        %1005 = vmatpush1.bf16.msra.mxu0 %v892
        %1006 = vmatprep.subr.bf16.mxu0 0
        %1007 = vmatpush1.bf16.msra.mxu0 %v893
        %1008 = vmatprep.subr.bf16.mxu0 0
        %1009 = vmatpush1.bf16.msra.mxu0 %v894
        %1010 = vmatprep.subr.bf16.mxu0 0
        %1011 = vmatpush1.bf16.msra.mxu0 %v895
        %1012 = vmatprep.subr.bf16.mxu0 0
        %1013 = vmatpush1.bf16.msra.mxu0 %v896
        %1014 = vmatprep.subr.bf16.mxu0 0
        %1015 = vmatpush1.bf16.msra.mxu0 %v897
        %1016 = vmatprep.subr.bf16.mxu0 0
        %1017 = vmatpush1.bf16.msra.mxu0 %v898
        %1018 = vmatprep.subr.bf16.mxu0 0
        %1019 = vmatpush1.bf16.msra.mxu0 %v899
        %1020 = vmatprep.mubr.bf16.mxu0 %v619
        %1021 = vmatmul.mubr.bf16.gmra.mrb[0].mxu0 %v618
        %v1022 = vpop.f32.mrb[0].mxu0
        %v1023 = vadd.f32 %v983, %v1022
        %v1024 = vpop.f32.mrb[0].mxu0
        %v1025 = vpop.f32.mrb[0].mxu0
        %v1026 = vpop.f32.mrb[0].mxu0
        %1027 = vdwg.mxu0
        %1028 = vmatprep.subr.bf16.mxu0 0
        %1029 = vmatpush1.bf16.msra.mxu0 %v900
        %1030 = vmatprep.subr.bf16.mxu0 0
        %1031 = vmatpush1.bf16.msra.mxu0 %v901
        %1032 = vmatprep.subr.bf16.mxu0 0
        %1033 = vmatpush1.bf16.msra.mxu0 %v902
        %1034 = vmatprep.subr.bf16.mxu0 0
        %1035 = vmatpush1.bf16.msra.mxu0 %v903
        %1036 = vmatprep.subr.bf16.mxu0 0
        %1037 = vmatpush1.bf16.msra.mxu0 %v904
        %1038 = vmatprep.subr.bf16.mxu0 0
        %1039 = vmatpush1.bf16.msra.mxu0 %v905
        %1040 = vmatprep.subr.bf16.mxu0 0
        %1041 = vmatpush1.bf16.msra.mxu0 %v906
        %1042 = vmatprep.subr.bf16.mxu0 0
        %1043 = vmatpush1.bf16.msra.mxu0 %v907
        %1044 = vmatprep.subr.bf16.mxu0 0
        %1045 = vmatpush1.bf16.msra.mxu0 0
        %1046 = vmatprep.subr.bf16.mxu0 0
        %1047 = vmatpush1.bf16.msra.mxu0 0
        %1048 = vmatprep.subr.bf16.mxu0 0
        %1049 = vmatpush1.bf16.msra.mxu0 0
        %1050 = vmatprep.subr.bf16.mxu0 0
        %1051 = vmatpush1.bf16.msra.mxu0 0
        %1052 = vmatprep.subr.bf16.mxu0 0
        %1053 = vmatpush1.bf16.msra.mxu0 0
        %1054 = vmatprep.subr.bf16.mxu0 0
        %1055 = vmatpush1.bf16.msra.mxu0 0
        %1056 = vmatprep.subr.bf16.mxu0 0
        %1057 = vmatpush1.bf16.msra.mxu0 0
        %1058 = vmatprep.subr.bf16.mxu0 0
        %1059 = vmatpush1.bf16.msra.mxu0 0
        %1060 = vmatprep.mubr.bf16.mxu0 0
        %1061 = vmatmul.mubr.bf16.gmra.mrb[0].mxu0 %v620
        %v1062 = vpop.f32.mrb[0].mxu0
        %v1063 = vadd.f32 %v1023, %v1062
        %v1064 = vpop.f32.mrb[0].mxu0
        %v1065 = vpop.f32.mrb[0].mxu0
        %v1066 = vpop.f32.mrb[0].mxu0
        %1067 = vdwg.mxu0
        %v1068 = vmax.f32 %v1063, 0.0
        %v1069 = vld [vmem:[#allocation2] sm:$0x1]
        %v1070 = vsel %vm610, %v1068, 0.0
        %v1071 = vrot.slane %v1070, 4
        %v1072 = vadd.f32 %v1070, %v1071
        %v1073 = vrot.slane %v1072, 2
        %v1074 = vadd.f32 %v1072, %v1073
        %v1075 = vrot.slane %v1074, 1
        %v1076 = vadd.f32 %v1074, %v1075
        %v1077 = vadd.f32 %v1069, %v1076
        %1078 = vst [vmem:[#allocation2] sm:$0x1] %v1077
        %v1079 = vld [vmem:[#allocation3] sm:$0x1]
        %v1081 = vrot.slane %v1068, 2
        %v1083 = vsel %vm610, %v1081, 0.0
        %v1084 = vrot.slane %v1083, 4
        %v1085 = vadd.f32 %v1083, %v1084
        %v1086 = vrot.slane %v1085, 2
        %v1087 = vadd.f32 %v1085, %v1086
        %v1088 = vrot.slane %v1087, 1
        %v1089 = vadd.f32 %v1087, %v1088
        %v1090 = vadd.f32 %v1079, %v1089
        %1091 = vst [vmem:[#allocation3] sm:$0x1] %v1090
        // Predicated region
        $region85: #{lrw_wer_forward.1} parent=59 // pred_check
          %p1092 = pneg %p520
        $region86: #{lrw_wer_forward.1} parent=59 // pred_check_branch
          %1094 = sbr.rel (%p1092) target = $region88
        $region87: #{lrw_wer_forward.1} parent=59 // pred_region
          %v1095 = vld [vmem:[#allocation2] sm:$0x1]
          %v1096 = vld [vmem:[#allocation3] sm:$0x1]
          %v1098 = vlaneseq
          %v1099 = vshrl.u32 %v1098, 7
          %v1100 = vsub.s32 0, %v1099
          %v1101 = vrot.slane %v1096, %v1100
          %vm1103 = vcmask 1040384
          %v1104 = vsel %vm1103, %v1095, %v1101
          %v1105 = vmul.f32 %v1104, 0.5
          %v1106 = vld [vmem:[#allocation12] sm:$0xff]
          %v1107 = vld [vmem:[#allocation12 + $0x8] sm:$0xff]
          %v1108 = vld [vmem:[#allocation12 + $0x10] sm:$0xff]
          %v1109 = vld [vmem:[#allocation12 + $0x18] sm:$0xff]
          %v1110 = vld [vmem:[#allocation12 + $0x20] sm:$0xff]
          %v1111 = vld [vmem:[#allocation12 + $0x28] sm:$0xff]
          %v1112 = vld [vmem:[#allocation12 + $0x30] sm:$0xff]
          %v1113 = vld [vmem:[#allocation12 + $0x38] sm:$0xff]
          %v1114 = vld [vmem:[#allocation12 + $0x40] sm:$0xff]
          %v1115 = vld [vmem:[#allocation12 + $0x48] sm:$0xff]
          %v1116 = vld [vmem:[#allocation12 + $0x50] sm:$0xff]
          %v1117 = vld [vmem:[#allocation12 + $0x58] sm:$0xff]
          %v1118 = vld [vmem:[#allocation12 + $0x60] sm:$0xff]
          %v1119 = vld [vmem:[#allocation12 + $0x68] sm:$0xff]
          %v1120 = vld [vmem:[#allocation12 + $0x70] sm:$0xff]
          %v1121 = vld [vmem:[#allocation12 + $0x78] sm:$0xff]
          %v1122 = vld [vmem:[%s9] sm:$0x1]
          %v1124 = vlaneseq
          %v1125 = vshrl.u32 %v1124, 7
          %v1126 = vsub.s32 0, %v1125
          %v1127 = vrot.slane %v1122, %v1126
          %1129 = vmatprep.subr.mxu0 0.0
          %1130 = vmatpush1.msra.mxu0 %v1106
          %1131 = vmatprep.subr.mxu0 0.0
          %1132 = vmatpush1.msra.mxu0 %v1107
          %1133 = vmatprep.subr.mxu0 0.0
          %1134 = vmatpush1.msra.mxu0 %v1108
          %1135 = vmatprep.subr.mxu0 0.0
          %1136 = vmatpush1.msra.mxu0 %v1109
          %1137 = vmatprep.subr.mxu0 0.0
          %1138 = vmatpush1.msra.mxu0 %v1110
          %1139 = vmatprep.subr.mxu0 0.0
          %1140 = vmatpush1.msra.mxu0 %v1111
          %1141 = vmatprep.subr.mxu0 0.0
          %1142 = vmatpush1.msra.mxu0 %v1112
          %1143 = vmatprep.subr.mxu0 0.0
          %1144 = vmatpush1.msra.mxu0 %v1113
          %1145 = vmatprep.subr.mxu0 0.0
          %1146 = vmatpush1.msra.mxu0 %v1114
          %1147 = vmatprep.subr.mxu0 0.0
          %1148 = vmatpush1.msra.mxu0 %v1115
          %1149 = vmatprep.subr.mxu0 0.0
          %1150 = vmatpush1.msra.mxu0 %v1116
          %1151 = vmatprep.subr.mxu0 0.0
          %1152 = vmatpush1.msra.mxu0 %v1117
          %1153 = vmatprep.subr.mxu0 0.0
          %1154 = vmatpush1.msra.mxu0 %v1118
          %1155 = vmatprep.subr.mxu0 0.0
          %1156 = vmatpush1.msra.mxu0 %v1119
          %1157 = vmatprep.subr.mxu0 0.0
          %1158 = vmatpush1.msra.mxu0 %v1120
          %1159 = vmatprep.subr.mxu0 0.0
          %1160 = vmatpush1.msra.mxu0 %v1121
          %1161 = vmatprep.subr.mxu0 0.0
          %1162 = vmatpush1.msra.mxu0 0.0
          %1163 = vmatprep.subr.mxu0 0.0
          %1164 = vmatpush1.msra.mxu0 0.0
          %1165 = vmatprep.subr.mxu0 0.0
          %1166 = vmatpush1.msra.mxu0 0.0
          %1167 = vmatprep.subr.mxu0 0.0
          %1168 = vmatpush1.msra.mxu0 0.0
          %1169 = vmatprep.subr.mxu0 0.0
          %1170 = vmatpush1.msra.mxu0 0.0
          %1171 = vmatprep.subr.mxu0 0.0
          %1172 = vmatpush1.msra.mxu0 0.0
          %1173 = vmatprep.subr.mxu0 0.0
          %1174 = vmatpush1.msra.mxu0 0.0
          %1175 = vmatprep.subr.mxu0 0.0
          %1176 = vmatpush1.msra.mxu0 0.0
          %1177 = vmatprep.subr.mxu0 0.0
          %1178 = vmatpush1.msra.mxu0 0.0
          %1179 = vmatprep.subr.mxu0 0.0
          %1180 = vmatpush1.msra.mxu0 0.0
          %1181 = vmatprep.subr.mxu0 0.0
          %1182 = vmatpush1.msra.mxu0 0.0
          %1183 = vmatprep.subr.mxu0 0.0
          %1184 = vmatpush1.msra.mxu0 0.0
          %1185 = vmatprep.subr.mxu0 0.0
          %1186 = vmatpush1.msra.mxu0 0.0
          %1187 = vmatprep.subr.mxu0 0.0
          %1188 = vmatpush1.msra.mxu0 0.0
          %1189 = vmatprep.subr.mxu0 0.0
          %1190 = vmatpush1.msra.mxu0 0.0
          %1191 = vmatprep.subr.mxu0 0.0
          %1192 = vmatpush1.msra.mxu0 0.0
          %1193 = vmatprep.mubr.f32.mxu0 0.0
          %1194 = vmatmul.mubr.f32.gmra.mrb[0].mxu0 %v1105
          %v1195 = vpop.f32.mrb[0].mxu0
          %v1196 = vadd.f32 %v1127, %v1195
          %v1197 = vpop.f32.mrb[0].mxu0
          %1198 = vdwg.mxu0
          %1199 = vst [vmem:[%s515] sm:$0x1] %v1196
          %1200 = vst [vmem:[%s518 - $0x1] sm:$0x2] %v1196
        $region88: #{lrw_wer_forward.1} parent=59 // pred_fallthru
          _
        %p1201 = scmp.lt.s32.totalorder %s31, 1
        %s1202 = scalar_select %p1201, %s31, 1
        %s1203 = scalar_lea.vmem %s10, %s1202
        %p1204 = scmp.lt.s32.totalorder %s31, 1
        %s1205 = scalar_select %p1204, %s31, 1
        %s1206 = scalar_lea.vmem %s11, %s1205
        // Predicated region
        $region89: #{lrw_wer_forward.1} parent=59 // pred_check
          %p1207 = pneg %p281
        $region90: #{lrw_wer_forward.1} parent=59 // pred_check_branch
          %1209 = sbr.rel (%p1207) target = $region92
        $region91: #{lrw_wer_forward.1} parent=59 // pred_region
          _
        $region92: #{lrw_wer_forward.1} parent=59 // pred_fallthru
          _
        // Predicated region
        $region93: #{lrw_wer_forward.1} parent=59 // pred_check
          %p1210 = pneg %p307
        $region94: #{lrw_wer_forward.1} parent=59 // pred_check_branch
          %1212 = sbr.rel (%p1210) target = $region96
        $region95: #{lrw_wer_forward.1} parent=59 // pred_region
          _
        $region96: #{lrw_wer_forward.1} parent=59 // pred_fallthru
          _
      $region60: #{lrw_wer_forward.1} parent=5 // pred_fallthru
        _
      %p1213 = scmp.le.s32.totalorder 2, %s22
      // Predicated region
      $region97: #{lrw_wer_forward.1} parent=5 // pred_check
        %p1214 = pneg %p1213
      $region98: #{lrw_wer_forward.1} parent=5 // pred_check_branch
        %1216 = sbr.rel (%p1214) target = $region100
      $region99: #{lrw_wer_forward.1} parent=5 // pred_region
        %s1217 = ssub.s32 %s22, 2
        // Predicated region
        $region101: #{lrw_wer_forward.1} parent=99 // pred_check
          %p1218 = pneg %p287
        $region102: #{lrw_wer_forward.1} parent=99 // pred_check_branch
          %1220 = sbr.rel (%p1218) target = $region104
        $region103: #{lrw_wer_forward.1} parent=99 // pred_region
          %p1221 = scmp.lt.s32.totalorder %s33, 1
          %s1222 = scalar_select %p1221, %s33, 1
          %s1223 = scalar_lea.vmem %s10, %s1222
        $region104: #{lrw_wer_forward.1} parent=99 // pred_fallthru
          _
        // Predicated region
        $region105: #{lrw_wer_forward.1} parent=99 // pred_check
          %p1224 = pneg %p313
        $region106: #{lrw_wer_forward.1} parent=99 // pred_check_branch
          %1226 = sbr.rel (%p1224) target = $region108
        $region107: #{lrw_wer_forward.1} parent=99 // pred_region
          %p1227 = scmp.lt.s32.totalorder %s33, 1
          %s1228 = scalar_select %p1227, %s33, 1
          %s1229 = scalar_lea.vmem %s11, %s1228
        $region108: #{lrw_wer_forward.1} parent=99 // pred_fallthru
          _
      $region100: #{lrw_wer_forward.1} parent=5 // pred_fallthru
        _
    $region6: #{lrw_wer_forward.1} parent=1 // loop_footer
      %s26 = sadd.s32 1, %s22
    $region7: #{lrw_wer_forward.1} parent=1 // loop_footer_branch
      %21 = sbr.rel target = $region3
    $region8: #{lrw_wer_forward.1} parent=1 // loop_exit
      _
    %1230 = vsyncpa [#allocation5], 1
    %s1231 = scalar_lea.sflag [#allocation5], 1
    %1232 = vsyncpa %s1231, 1
    %1233 = vsyncpa [#allocation6], 1
    %s1234 = scalar_lea.sflag [#allocation6], 1
    %1235 = vsyncpa %s1234, 1
    %1236 = vsyncpa [#allocation8], 1
    %1237 = vsyncpa [#allocation11], 1

</llo_original>
